<compile_context>
chip_gen: v5e
topology: v5e:2x2
jax: 0.10.0
libtpu: 0.0.40
codegen_flags: <defaults>
</compile_context>

<pallas_src>
import functools

import jax
import jax.numpy as jnp
from jax.experimental import pallas as pl
from jax.experimental.pallas import tpu as pltpu

HID = 256          # hidden width of the MLP
LANE = 128         # TPU lane width (feature padding granularity)


def _round_up(n, m):
    return pl.cdiv(n, m) * m


def inverse_dynamics_kernel(x_ref, w_in_ref, w_hid_ref, w_out_ref, b_ref, o_ref):
    """One batch tile of the 8-layer MLP.

    x_ref     : (TB, IN_PAD)        f32   input tile
    w_in_ref  : (IN_PAD, 512)       cdt   [:, :256]=layer0 W, [:, 256:]=x-half of layer4 W
    w_hid_ref : (6, 256, 256)       cdt   [L1, L2, L3, h-half of L4, L5, L6]
    w_out_ref : (256, OUT_PAD)      cdt   layer7 W
    b_ref     : (8, BW)             f32   biases (row k = layer k, zero padded)
    o_ref     : (TB, OUT_PAD)       f32   output tile
    """
    # TODO(synk): nn.Dropout has no inference-time effect; omitted (eval-mode semantics).
    out_pad = o_ref.shape[-1]
    cdt = w_in_ref.dtype                              # compute dtype (bf16 or f32)
    b = b_ref[...]                                    # (8, BW) f32

    def mm(a, w):
        # MXU matmul in the compute dtype, f32 accumulation.
        return jnp.dot(a, w, preferred_element_type=jnp.float32)

    def relu_c(z):
        # bias-add/ReLU stay f32 (VPU); single cast back to the compute dtype.
        return jnp.maximum(z, 0.0).astype(cdt)

    x = x_ref[...].astype(cdt)                        # cast x exactly once
    # Fused input matmul: layer 0 and the x-skip term of layer 4 in one MXU push.
    t = mm(x, w_in_ref[...])                          # (TB, 512) f32
    x4 = t[:, HID:]                                   # f32 skip term for layer 4
    h = relu_c(t[:, :HID] + b[0:1, :HID])             # layer 0: in -> 256
    h = relu_c(mm(h, w_hid_ref[0]) + b[1:2, :HID])    # layer 1
    h = relu_c(mm(h, w_hid_ref[1]) + b[2:3, :HID])    # layer 2
    h = relu_c(mm(h, w_hid_ref[2]) + b[3:4, :HID])    # layer 3
    # layer 4: Linear(concat([h, x])) == h @ W_h + x @ W_x + b  (no lane concat)
    h = relu_c(mm(h, w_hid_ref[3]) + x4 + b[4:5, :HID])
    h = relu_c(mm(h, w_hid_ref[4]) + b[5:6, :HID])    # layer 5
    h = relu_c(mm(h, w_hid_ref[5]) + b[6:7, :HID])    # layer 6
    # layer 7 + final ReLU (module ends with ReLU), output in f32
    o_ref[...] = jnp.maximum(mm(h, w_out_ref[...]) + b[7:8, :out_pad], 0.0)


def pack_params(params, input_dim, output_dim, compute_dtype=jnp.bfloat16):
    """One-time packing of the 8 (W, b) pairs into 4 TPU-friendly arrays.

    Call once; pass the result to inverse_dynamics_forward on every call
    (the per-call packing cost dominated the kernel for small batches).
    W are stored as (in, out) (transposed vs. PyTorch nn.Linear.weight).
    """
    in_pad = _round_up(input_dim, LANE)
    out_pad = _round_up(output_dim, LANE)
    bw = max(HID, out_pad)

    w0, _ = params[0]                       # (input_dim, 256)
    w4, _ = params[4]                       # (256 + input_dim, 256)
    w7, b7 = params[7]                      # (256, output_dim)

    # Fused input weight: columns [0:256] = layer-0 W, [256:512] = x-half of layer-4 W.
    w_in = jnp.zeros((in_pad, 2 * HID), compute_dtype)
    w_in = w_in.at[:input_dim, :HID].set(w0.astype(compute_dtype))
    w_in = w_in.at[:input_dim, HID:].set(w4[HID:, :].astype(compute_dtype))

    w_hid = jnp.stack(
        [params[1][0], params[2][0], params[3][0],
         w4[:HID, :], params[5][0], params[6][0]]).astype(compute_dtype)   # (6,256,256)

    w_out = jnp.zeros((HID, out_pad), compute_dtype)
    w_out = w_out.at[:, :output_dim].set(w7.astype(compute_dtype))

    biases = jnp.zeros((8, bw), jnp.float32)
    for k in range(7):
        biases = biases.at[k, :HID].set(params[k][1])
    biases = biases.at[7, :output_dim].set(b7)

    return {"w_in": w_in, "w_hid": w_hid, "w_out": w_out, "biases": biases}


@functools.partial(jax.jit, static_argnames=("output_dim", "tile_b"))
def inverse_dynamics_forward(x, packed, *, output_dim, tile_b=None):
    """x: (B, input_dim) float32.  packed: output of pack_params()."""
    B, input_dim = x.shape
    w_in, w_hid = packed["w_in"], packed["w_hid"]
    w_out, biases = packed["w_out"], packed["biases"]
    in_pad = w_in.shape[0]
    out_pad = w_out.shape[1]
    bw = biases.shape[1]

    if tile_b is None:
        if B <= 64:
            # Launch/DMA dominated: one grid step with the whole (padded) batch.
            tile_b = _round_up(B, 8)
        elif B <= 1024:
            # Two grid steps so the "parallel" batch axis can shard across both
            # v7x TensorCores (neutral on v5e/v6e).
            tile_b = _round_up(pl.cdiv(B, 2), 8)
        else:
            # Large batch: 512-row MXU-aligned tiles to amortize per-step overhead.
            tile_b = 512
    b_pad = _round_up(B, tile_b)

    x_p = jnp.pad(x.astype(jnp.float32),
                  ((0, b_pad - B), (0, in_pad - input_dim)))

    grid = (b_pad // tile_b,)
    in_specs = [
        pl.BlockSpec((tile_b, in_pad), lambda i: (i, 0)),        # x tile (pipelined)
        pl.BlockSpec((in_pad, 2 * HID), lambda i: (0, 0)),       # fused input weights
        pl.BlockSpec((6, HID, HID), lambda i: (0, 0, 0)),        # stacked 256x256 weights
        pl.BlockSpec((HID, out_pad), lambda i: (0, 0)),          # output-head weight
        pl.BlockSpec((8, bw), lambda i: (0, 0)),                 # all biases
    ]

    out_p = pl.pallas_call(
        inverse_dynamics_kernel,
        out_shape=jax.ShapeDtypeStruct((b_pad, out_pad), jnp.float32),
        grid_spec=pltpu.PrefetchScalarGridSpec(
            num_scalar_prefetch=0,
            grid=grid,
            in_specs=in_specs,
            out_specs=pl.BlockSpec((tile_b, out_pad), lambda i: (i, 0)),
        ),
        compiler_params=pltpu.CompilerParams(
            dimension_semantics=("parallel",),
        ),
    )(x_p, w_in, w_hid, w_out, biases)

    return out_p[:B, :output_dim]


def make_params(key, input_dim, output_dim):
    """Deterministic synthetic parameters. W stored as (in, out) (transposed vs. PyTorch)."""
    dims = [
        (input_dim, HID), (HID, HID), (HID, HID), (HID, HID),
        (HID + input_dim, HID), (HID, HID), (HID, HID), (HID, output_dim),
    ]
    params = []
    for (din, dout) in dims:
        key, kw, kb = jax.random.split(key, 3)
        scale = 1.0 / jnp.sqrt(jnp.float32(din))
        w = jax.random.uniform(kw, (din, dout), jnp.float32, -scale, scale)
        b = jax.random.uniform(kb, (dout,), jnp.float32, -scale, scale)
        params.append((w, b))
    return params


def reference_forward(x, params):
    """Pure-JAX reference mirroring the PyTorch forward (eval mode)."""
    h = x
    for i in range(4):
        w, b = params[i]
        h = jnp.maximum(h @ w + b, 0.0)
    h = jnp.concatenate([h, x], axis=-1)
    for i in range(4, 8):
        w, b = params[i]
        h = jnp.maximum(h @ w + b, 0.0)
    return h


if __name__ == "__main__":
    INPUT_DIM = 7    # achieved delta pose (xyz + orientation + gripper)
    OUTPUT_DIM = 7
    BATCH = 32

    key = jax.random.PRNGKey(0)
    kx, kx2, kp = jax.random.split(key, 3)
    x = jax.random.normal(kx, (BATCH, INPUT_DIM), jnp.float32)
    params = make_params(kp, INPUT_DIM, OUTPUT_DIM)

    y_ref = reference_forward(x, params)

    # Exact (f32 MXU) debug path: tight check against the pure-JAX reference.
    packed_f32 = pack_params(params, INPUT_DIM, OUTPUT_DIM, compute_dtype=jnp.float32)
    y_f32 = jax.block_until_ready(
        inverse_dynamics_forward(x, packed_f32, output_dim=OUTPUT_DIM))
    assert y_f32.shape == (BATCH, OUTPUT_DIM), y_f32.shape
    assert jnp.allclose(y_f32, y_ref, atol=1e-4, rtol=1e-4), "f32 mismatch vs reference"

    # Fast (bf16 MXU, f32 accumulation) default path: looser tolerance from bf16 weights/activations.
    packed_bf16 = pack_params(params, INPUT_DIM, OUTPUT_DIM)   # packed once, reused per call
    y_bf16 = jax.block_until_ready(
        inverse_dynamics_forward(x, packed_bf16, output_dim=OUTPUT_DIM))
    assert y_bf16.shape == (BATCH, OUTPUT_DIM), y_bf16.shape
    assert jnp.allclose(y_bf16, y_ref, atol=5e-2, rtol=5e-2), "bf16 mismatch vs reference"

    # Mid-size batch: exercises the 2-step grid (both v7x TCs) and padded batch rows.
    x_mid = jax.random.normal(kx2, (200, INPUT_DIM), jnp.float32)
    y_mid_ref = reference_forward(x_mid, params)
    y_mid = jax.block_until_ready(
        inverse_dynamics_forward(x_mid, packed_bf16, output_dim=OUTPUT_DIM))
    assert y_mid.shape == (200, OUTPUT_DIM), y_mid.shape
    assert jnp.allclose(y_mid, y_mid_ref, atol=5e-2, rtol=5e-2), "bf16 multi-tile mismatch"

    print("KERNEL_OK")
</pallas_src>

<mosaic_0001>
module attributes {stable_mosaic.version = 11 : i64} {
  func.func @inverse_dynamics_kernel(%arg0: i32, %arg1: memref<32x128xf32, #tpu.memory_space<vmem>>, %arg2: memref<128x512xf32, #tpu.memory_space<vmem>>, %arg3: memref<6x256x256xf32, #tpu.memory_space<vmem>>, %arg4: memref<256x128xf32, #tpu.memory_space<vmem>>, %arg5: memref<8x256xf32, #tpu.memory_space<vmem>>, %arg6: memref<32x128xf32, #tpu.memory_space<vmem>>) attributes {dimension_semantics = [#tpu.dimension_semantics<parallel>], iteration_bounds = array<i64: 1>, scalar_prefetch = 0 : i64, scratch_operands = 0 : i64, tpu.core_type = #tpu.core_type<tc>, window_params = [{transform_indices = @transform_0, window_bounds = array<i64: 32, 128>}, {pipeline_mode = #tpu.pipeline_mode<synchronous>, transform_indices = @transform_1, window_bounds = array<i64: 128, 512>}, {pipeline_mode = #tpu.pipeline_mode<synchronous>, transform_indices = @transform_2, window_bounds = array<i64: 6, 256, 256>}, {pipeline_mode = #tpu.pipeline_mode<synchronous>, transform_indices = @transform_3, window_bounds = array<i64: 256, 128>}, {pipeline_mode = #tpu.pipeline_mode<synchronous>, transform_indices = @transform_4, window_bounds = array<i64: 8, 256>}, {transform_indices = @transform_5, window_bounds = array<i64: 32, 128>}]} {
    %c0 = arith.constant 0 : index
    %c0_0 = arith.constant 0 : index
    %0 = vector.load %arg5[%c0, %c0_0] : memref<8x256xf32, #tpu.memory_space<vmem>>, vector<8x256xf32>
    %c0_1 = arith.constant 0 : index
    %c0_2 = arith.constant 0 : index
    %1 = vector.load %arg1[%c0_1, %c0_2] : memref<32x128xf32, #tpu.memory_space<vmem>>, vector<32x128xf32>
    %c0_3 = arith.constant 0 : index
    %c0_4 = arith.constant 0 : index
    %2 = vector.load %arg2[%c0_3, %c0_4] : memref<128x512xf32, #tpu.memory_space<vmem>>, vector<128x512xf32>
    %cst = arith.constant dense<0.000000e+00> : vector<32x512xf32>
    %3 = tpu.matmul %1, %2, %cst {dimension_numbers = #tpu.dot_dimension_numbers<[1], [0], [0], [1], [0, 0, 1, 1], [], []>} : vector<32x128xf32>, vector<128x512xf32>, vector<32x512xf32> -> vector<32x512xf32>
    %4 = vector.extract_strided_slice %3 {offsets = [0, 256], sizes = [32, 256], strides = [1, 1]} : vector<32x512xf32> to vector<32x256xf32>
    %5 = vector.extract_strided_slice %3 {offsets = [0, 0], sizes = [32, 256], strides = [1, 1]} : vector<32x512xf32> to vector<32x256xf32>
    %6 = vector.extract_strided_slice %0 {offsets = [0, 0], sizes = [1, 256], strides = [1, 1]} : vector<8x256xf32> to vector<1x256xf32>
    %7 = vector.broadcast %6 : vector<1x256xf32> to vector<32x256xf32>
    %8 = arith.addf %5, %7 : vector<32x256xf32>
    %cst_5 = arith.constant 0.000000e+00 : f32
    %9 = vector.broadcast %cst_5 : f32 to vector<32x256xf32>
    %10 = arith.maximumf %8, %9 : vector<32x256xf32>
    %c0_6 = arith.constant 0 : index
    %c0_7 = arith.constant 0 : index
    %c0_8 = arith.constant 0 : index
    %11 = vector.load %arg3[%c0_6, %c0_7, %c0_8] : memref<6x256x256xf32, #tpu.memory_space<vmem>>, vector<1x256x256xf32>
    %12 = vector.shape_cast %11 : vector<1x256x256xf32> to vector<256x256xf32>
    %cst_9 = arith.constant dense<0.000000e+00> : vector<32x256xf32>
    %13 = tpu.matmul %10, %12, %cst_9 {dimension_numbers = #tpu.dot_dimension_numbers<[1], [0], [0], [1], [0, 0, 1, 1], [], []>} : vector<32x256xf32>, vector<256x256xf32>, vector<32x256xf32> -> vector<32x256xf32>
    %14 = vector.extract_strided_slice %0 {offsets = [1, 0], sizes = [1, 256], strides = [1, 1]} : vector<8x256xf32> to vector<1x256xf32>
    %15 = vector.broadcast %14 : vector<1x256xf32> to vector<32x256xf32>
    %16 = arith.addf %13, %15 : vector<32x256xf32>
    %cst_10 = arith.constant 0.000000e+00 : f32
    %17 = vector.broadcast %cst_10 : f32 to vector<32x256xf32>
    %18 = arith.maximumf %16, %17 : vector<32x256xf32>
    %c1 = arith.constant 1 : index
    %c0_11 = arith.constant 0 : index
    %c0_12 = arith.constant 0 : index
    %19 = vector.load %arg3[%c1, %c0_11, %c0_12] : memref<6x256x256xf32, #tpu.memory_space<vmem>>, vector<1x256x256xf32>
    %20 = vector.shape_cast %19 : vector<1x256x256xf32> to vector<256x256xf32>
    %cst_13 = arith.constant dense<0.000000e+00> : vector<32x256xf32>
    %21 = tpu.matmul %18, %20, %cst_13 {dimension_numbers = #tpu.dot_dimension_numbers<[1], [0], [0], [1], [0, 0, 1, 1], [], []>} : vector<32x256xf32>, vector<256x256xf32>, vector<32x256xf32> -> vector<32x256xf32>
    %22 = vector.extract_strided_slice %0 {offsets = [2, 0], sizes = [1, 256], strides = [1, 1]} : vector<8x256xf32> to vector<1x256xf32>
    %23 = vector.broadcast %22 : vector<1x256xf32> to vector<32x256xf32>
    %24 = arith.addf %21, %23 : vector<32x256xf32>
    %cst_14 = arith.constant 0.000000e+00 : f32
    %25 = vector.broadcast %cst_14 : f32 to vector<32x256xf32>
    %26 = arith.maximumf %24, %25 : vector<32x256xf32>
    %c2 = arith.constant 2 : index
    %c0_15 = arith.constant 0 : index
    %c0_16 = arith.constant 0 : index
    %27 = vector.load %arg3[%c2, %c0_15, %c0_16] : memref<6x256x256xf32, #tpu.memory_space<vmem>>, vector<1x256x256xf32>
    %28 = vector.shape_cast %27 : vector<1x256x256xf32> to vector<256x256xf32>
    %cst_17 = arith.constant dense<0.000000e+00> : vector<32x256xf32>
    %29 = tpu.matmul %26, %28, %cst_17 {dimension_numbers = #tpu.dot_dimension_numbers<[1], [0], [0], [1], [0, 0, 1, 1], [], []>} : vector<32x256xf32>, vector<256x256xf32>, vector<32x256xf32> -> vector<32x256xf32>
    %30 = vector.extract_strided_slice %0 {offsets = [3, 0], sizes = [1, 256], strides = [1, 1]} : vector<8x256xf32> to vector<1x256xf32>
    %31 = vector.broadcast %30 : vector<1x256xf32> to vector<32x256xf32>
    %32 = arith.addf %29, %31 : vector<32x256xf32>
    %cst_18 = arith.constant 0.000000e+00 : f32
    %33 = vector.broadcast %cst_18 : f32 to vector<32x256xf32>
    %34 = arith.maximumf %32, %33 : vector<32x256xf32>
    %c3 = arith.constant 3 : index
    %c0_19 = arith.constant 0 : index
    %c0_20 = arith.constant 0 : index
    %35 = vector.load %arg3[%c3, %c0_19, %c0_20] : memref<6x256x256xf32, #tpu.memory_space<vmem>>, vector<1x256x256xf32>
    %36 = vector.shape_cast %35 : vector<1x256x256xf32> to vector<256x256xf32>
    %cst_21 = arith.constant dense<0.000000e+00> : vector<32x256xf32>
    %37 = tpu.matmul %34, %36, %cst_21 {dimension_numbers = #tpu.dot_dimension_numbers<[1], [0], [0], [1], [0, 0, 1, 1], [], []>} : vector<32x256xf32>, vector<256x256xf32>, vector<32x256xf32> -> vector<32x256xf32>
    %38 = arith.addf %37, %4 : vector<32x256xf32>
    %39 = vector.extract_strided_slice %0 {offsets = [4, 0], sizes = [1, 256], strides = [1, 1]} : vector<8x256xf32> to vector<1x256xf32>
    %40 = vector.broadcast %39 : vector<1x256xf32> to vector<32x256xf32>
    %41 = arith.addf %38, %40 : vector<32x256xf32>
    %cst_22 = arith.constant 0.000000e+00 : f32
    %42 = vector.broadcast %cst_22 : f32 to vector<32x256xf32>
    %43 = arith.maximumf %41, %42 : vector<32x256xf32>
    %c4 = arith.constant 4 : index
    %c0_23 = arith.constant 0 : index
    %c0_24 = arith.constant 0 : index
    %44 = vector.load %arg3[%c4, %c0_23, %c0_24] : memref<6x256x256xf32, #tpu.memory_space<vmem>>, vector<1x256x256xf32>
    %45 = vector.shape_cast %44 : vector<1x256x256xf32> to vector<256x256xf32>
    %cst_25 = arith.constant dense<0.000000e+00> : vector<32x256xf32>
    %46 = tpu.matmul %43, %45, %cst_25 {dimension_numbers = #tpu.dot_dimension_numbers<[1], [0], [0], [1], [0, 0, 1, 1], [], []>} : vector<32x256xf32>, vector<256x256xf32>, vector<32x256xf32> -> vector<32x256xf32>
    %47 = vector.extract_strided_slice %0 {offsets = [5, 0], sizes = [1, 256], strides = [1, 1]} : vector<8x256xf32> to vector<1x256xf32>
    %48 = vector.broadcast %47 : vector<1x256xf32> to vector<32x256xf32>
    %49 = arith.addf %46, %48 : vector<32x256xf32>
    %cst_26 = arith.constant 0.000000e+00 : f32
    %50 = vector.broadcast %cst_26 : f32 to vector<32x256xf32>
    %51 = arith.maximumf %49, %50 : vector<32x256xf32>
    %c5 = arith.constant 5 : index
    %c0_27 = arith.constant 0 : index
    %c0_28 = arith.constant 0 : index
    %52 = vector.load %arg3[%c5, %c0_27, %c0_28] : memref<6x256x256xf32, #tpu.memory_space<vmem>>, vector<1x256x256xf32>
    %53 = vector.shape_cast %52 : vector<1x256x256xf32> to vector<256x256xf32>
    %cst_29 = arith.constant dense<0.000000e+00> : vector<32x256xf32>
    %54 = tpu.matmul %51, %53, %cst_29 {dimension_numbers = #tpu.dot_dimension_numbers<[1], [0], [0], [1], [0, 0, 1, 1], [], []>} : vector<32x256xf32>, vector<256x256xf32>, vector<32x256xf32> -> vector<32x256xf32>
    %55 = vector.extract_strided_slice %0 {offsets = [6, 0], sizes = [1, 256], strides = [1, 1]} : vector<8x256xf32> to vector<1x256xf32>
    %56 = vector.broadcast %55 : vector<1x256xf32> to vector<32x256xf32>
    %57 = arith.addf %54, %56 : vector<32x256xf32>
    %cst_30 = arith.constant 0.000000e+00 : f32
    %58 = vector.broadcast %cst_30 : f32 to vector<32x256xf32>
    %59 = arith.maximumf %57, %58 : vector<32x256xf32>
    %c0_31 = arith.constant 0 : index
    %c0_32 = arith.constant 0 : index
    %60 = vector.load %arg4[%c0_31, %c0_32] : memref<256x128xf32, #tpu.memory_space<vmem>>, vector<256x128xf32>
    %cst_33 = arith.constant dense<0.000000e+00> : vector<32x128xf32>
    %61 = tpu.matmul %59, %60, %cst_33 {dimension_numbers = #tpu.dot_dimension_numbers<[1], [0], [0], [1], [0, 0, 1, 1], [], []>} : vector<32x256xf32>, vector<256x128xf32>, vector<32x128xf32> -> vector<32x128xf32>
    %62 = vector.extract_strided_slice %0 {offsets = [7, 0], sizes = [1, 128], strides = [1, 1]} : vector<8x256xf32> to vector<1x128xf32>
    %63 = vector.broadcast %62 : vector<1x128xf32> to vector<32x128xf32>
    %64 = arith.addf %61, %63 : vector<32x128xf32>
    %cst_34 = arith.constant 0.000000e+00 : f32
    %65 = vector.broadcast %cst_34 : f32 to vector<32x128xf32>
    %66 = arith.maximumf %64, %65 : vector<32x128xf32>
    %c0_35 = arith.constant 0 : index
    %c0_36 = arith.constant 0 : index
    %67 = vector.load %arg6[%c0_35, %c0_36] : memref<32x128xf32, #tpu.memory_space<vmem>>, vector<32x128xf32>
    tpu.vector_store %arg6[%c0_35, %c0_36], %66 {strides = array<i32>} : memref<32x128xf32, #tpu.memory_space<vmem>>, vector<32x128xf32>,
    return
  }
  func.func @transform_0(%arg0: i32) -> (i32, i32) {
    %c0_i32 = arith.constant 0 : i32
    %c0_i32_0 = arith.constant 0 : i32
    return %arg0, %c0_i32 : i32, i32
  }
  func.func @transform_1(%arg0: i32) -> (i32, i32) {
    %c0_i32 = arith.constant 0 : i32
    %c0_i32_0 = arith.constant 0 : i32
    %c0_i32_1 = arith.constant 0 : i32
    return %c0_i32, %c0_i32_0 : i32, i32
  }
  func.func @transform_2(%arg0: i32) -> (i32, i32, i32) {
    %c0_i32 = arith.constant 0 : i32
    %c0_i32_0 = arith.constant 0 : i32
    %c0_i32_1 = arith.constant 0 : i32
    %c0_i32_2 = arith.constant 0 : i32
    return %c0_i32, %c0_i32_0, %c0_i32_1 : i32, i32, i32
  }
  func.func @transform_3(%arg0: i32) -> (i32, i32) {
    %c0_i32 = arith.constant 0 : i32
    %c0_i32_0 = arith.constant 0 : i32
    %c0_i32_1 = arith.constant 0 : i32
    return %c0_i32, %c0_i32_0 : i32, i32
  }
  func.func @transform_4(%arg0: i32) -> (i32, i32) {
    %c0_i32 = arith.constant 0 : i32
    %c0_i32_0 = arith.constant 0 : i32
    %c0_i32_1 = arith.constant 0 : i32
    return %c0_i32, %c0_i32_0 : i32, i32
  }
  func.func @transform_5(%arg0: i32) -> (i32, i32) {
    %c0_i32 = arith.constant 0 : i32
    %c0_i32_0 = arith.constant 0 : i32
    return %arg0, %c0_i32 : i32, i32
  }
}

</mosaic_0001>

<llo_original>
// kernel: inverse_dynamics_forward.1
$region0: #{inverse_dynamics_forward.1}
  #allocation0 [shape = 'u32[]', space=smem, size = 0x4, offset = 0x4, fixed_abs, tag = 'smem constant byte address 0x4 - core index']
  #allocation1 [shape = 'u32[72,128]{1,0:T(1,128)}', space=vmem, size = 0x9000, scoped, tag = 'internal scratch']
  %s0 = inlined_call_operand.vmem [shape: f32[32,128], index: 0, kind: input, shape index: {}]
  %s1 = inlined_call_operand.hbm [shape: f32[128,512], index: 1, kind: input, shape index: {}]
  %s2 = inlined_call_operand.hbm [shape: f32[6,256,256], index: 2, kind: input, shape index: {}]
  %s3 = inlined_call_operand.hbm [shape: f32[256,128], index: 3, kind: input, shape index: {}]
  %s4 = inlined_call_operand.hbm [shape: f32[8,256], index: 4, kind: input, shape index: {}]
  %s5 = inlined_call_operand.vmem [shape: f32[32,128], index: 5, kind: output, shape index: {}]
  %s6 = sld [smem:[#allocation0]]
  $region46: #{inverse_dynamics_forward.1} parent=0
    _
  %s8 = ssub.s32 1, %s6
  %s9 = scalar_select 0, %s8, %s6
  $region1: #{inverse_dynamics_forward.1} parent=0
    #allocation2 [shape = 'u8[262144]{0}', space=vmem, size = 0x40000, scoped, tag = 'input window, operand 1, single buffered']
    #allocation3 [shape = 's32[1]{0}', space=sflag, size = 0x4, scoped, tag = 'scoped memory for inverse_dynamics_forward.1']
    #allocation4 [shape = 'u8[1572864]{0}', space=vmem, size = 0x180000, scoped, tag = 'input window, operand 2, single buffered']
    #allocation5 [shape = 's32[1]{0}', space=sflag, size = 0x4, scoped, tag = 'scoped memory for inverse_dynamics_forward.1']
    #allocation6 [shape = 'u8[131072]{0}', space=vmem, size = 0x20000, scoped, tag = 'input window, operand 3, single buffered']
    #allocation7 [shape = 'u8[8192]{0}', space=vmem, size = 0x2000, scoped, tag = 'input window, operand 4, single buffered']
    #allocation8 [shape = 's32[1]{0}', space=sflag, size = 0x4, scoped, tag = 'scoped memory for inverse_dynamics_forward.1']
    %10 = vsyncpa [#allocation3], 0
    %11 = vsyncpa [#allocation5], 0
    %12 = vsyncpa [#allocation8], 0
    // Predicated region
    $region2: #{inverse_dynamics_forward.1} parent=1 // pred_check
      _
    $region3: #{inverse_dynamics_forward.1} parent=1 // pred_check_branch
      %14 = sbr.rel (0) target = $region5
    $region4: #{inverse_dynamics_forward.1} parent=1 // pred_region
      _
    $region5: #{inverse_dynamics_forward.1} parent=1 // pred_fallthru
      _
    // Predicated region
    $region6: #{inverse_dynamics_forward.1} parent=1 // pred_check
      _
    $region7: #{inverse_dynamics_forward.1} parent=1 // pred_check_branch
      %16 = sbr.rel (0) target = $region9
    $region8: #{inverse_dynamics_forward.1} parent=1 // pred_region
      %18 = vsyncadd [#allocation3], 0
      %s19 = sshll.u32 %s1, 4
      %s20 = int_to_ptr.hbm [resolvable:$true] %s19
      %s21 = sshll.u32 [#allocation2], 4
      %s22 = int_to_ptr.vmem [resolvable:$true] %s21
      %27 = dma.hbm_to_vmem [thread:$0]  %s20, 8192, %s22, [#allocation3], 512, 512, 32
    $region9: #{inverse_dynamics_forward.1} parent=1 // pred_fallthru
      _
    // Predicated region
    $region10: #{inverse_dynamics_forward.1} parent=1 // pred_check
      _
    $region11: #{inverse_dynamics_forward.1} parent=1 // pred_check_branch
      %29 = sbr.rel (0) target = $region13
    $region12: #{inverse_dynamics_forward.1} parent=1 // pred_region
      %31 = vsyncadd [#allocation5], 0
      %s32 = sshll.u32 %s2, 4
      %s33 = int_to_ptr.hbm [resolvable:$true] %s32
      %s34 = sshll.u32 [#allocation4], 4
      %s35 = int_to_ptr.vmem [resolvable:$true] %s34
      %40 = dma.hbm_to_vmem [thread:$0]  %s33, 49152, %s35, [#allocation5], 256, 256, 16
    $region13: #{inverse_dynamics_forward.1} parent=1 // pred_fallthru
      _
    // Predicated region
    $region14: #{inverse_dynamics_forward.1} parent=1 // pred_check
      _
    $region15: #{inverse_dynamics_forward.1} parent=1 // pred_check_branch
      %42 = sbr.rel (0) target = $region17
    $region16: #{inverse_dynamics_forward.1} parent=1 // pred_region
      %44 = vsyncadd [#allocation5], 0
      %s45 = sshll.u32 %s3, 4
      %s46 = int_to_ptr.hbm [resolvable:$true] %s45
      %s47 = sshll.u32 [#allocation6], 4
      %s48 = int_to_ptr.vmem [resolvable:$true] %s47
      %53 = dma.hbm_to_vmem [thread:$0]  %s46, 4096, %s48, [#allocation5], 128, 128, 8
    $region17: #{inverse_dynamics_forward.1} parent=1 // pred_fallthru
      _
    // Predicated region
    $region18: #{inverse_dynamics_forward.1} parent=1 // pred_check
      _
    $region19: #{inverse_dynamics_forward.1} parent=1 // pred_check_branch
      %55 = sbr.rel (0) target = $region21
    $region20: #{inverse_dynamics_forward.1} parent=1 // pred_region
      %57 = vsyncadd [#allocation8], 0
      %s59 = sshll.u32 %s4, 4
      %s60 = int_to_ptr.hbm [resolvable:$true] %s59
      %s61 = sshll.u32 [#allocation7], 4
      %s62 = int_to_ptr.vmem [resolvable:$true] %s61
      %64 = dma.hbm_to_vmem [thread:$0]  %s60, 256, %s62, [#allocation8]
    $region21: #{inverse_dynamics_forward.1} parent=1 // pred_fallthru
      _
    // Predicated region
    $region22: #{inverse_dynamics_forward.1} parent=1 // pred_check
      _
    $region23: #{inverse_dynamics_forward.1} parent=1 // pred_check_branch
      %66 = sbr.rel (0) target = $region25
    $region24: #{inverse_dynamics_forward.1} parent=1 // pred_region
      %68 = dma.done [#allocation3], 8192
    $region25: #{inverse_dynamics_forward.1} parent=1 // pred_fallthru
      _
    // Predicated region
    $region26: #{inverse_dynamics_forward.1} parent=1 // pred_check
      _
    $region27: #{inverse_dynamics_forward.1} parent=1 // pred_check_branch
      %70 = sbr.rel (0) target = $region29
    $region28: #{inverse_dynamics_forward.1} parent=1 // pred_region
      %72 = dma.done [#allocation5], 49152
    $region29: #{inverse_dynamics_forward.1} parent=1 // pred_fallthru
      _
    // Predicated region
    $region30: #{inverse_dynamics_forward.1} parent=1 // pred_check
      _
    $region31: #{inverse_dynamics_forward.1} parent=1 // pred_check_branch
      %74 = sbr.rel (0) target = $region33
    $region32: #{inverse_dynamics_forward.1} parent=1 // pred_region
      %76 = dma.done [#allocation5], 4096
    $region33: #{inverse_dynamics_forward.1} parent=1 // pred_fallthru
      _
    // Predicated region
    $region34: #{inverse_dynamics_forward.1} parent=1 // pred_check
      _
    $region35: #{inverse_dynamics_forward.1} parent=1 // pred_check_branch
      %78 = sbr.rel (0) target = $region37
    $region36: #{inverse_dynamics_forward.1} parent=1 // pred_region
      %80 = dma.done [#allocation8], 256
    $region37: #{inverse_dynamics_forward.1} parent=1 // pred_fallthru
      _
    %v81 = vld [vmem:[#allocation7] sm:$0xff]
    %v82 = vld [vmem:[#allocation7 + $0x8] sm:$0xff]
    %v83 = vld [vmem:[%s0] sm:$0xff]
    %v84 = vld [vmem:[%s0 + $0x8] sm:$0xff]
    %v85 = vld [vmem:[%s0 + $0x10] sm:$0xff]
    %v86 = vld [vmem:[%s0 + $0x18] sm:$0xff]
    %v87 = vld [vmem:[#allocation2] sm:$0xff]
    %v88 = vld [vmem:[#allocation2 + $0x8] sm:$0xff]
    %v89 = vld [vmem:[#allocation2 + $0x10] sm:$0xff]
    %v90 = vld [vmem:[#allocation2 + $0x18] sm:$0xff]
    %v91 = vld [vmem:[#allocation2 + $0x20] sm:$0xff]
    %v92 = vld [vmem:[#allocation2 + $0x28] sm:$0xff]
    %v93 = vld [vmem:[#allocation2 + $0x30] sm:$0xff]
    %v94 = vld [vmem:[#allocation2 + $0x38] sm:$0xff]
    %v95 = vld [vmem:[#allocation2 + $0x40] sm:$0xff]
    %v96 = vld [vmem:[#allocation2 + $0x48] sm:$0xff]
    %v97 = vld [vmem:[#allocation2 + $0x50] sm:$0xff]
    %v98 = vld [vmem:[#allocation2 + $0x58] sm:$0xff]
    %v99 = vld [vmem:[#allocation2 + $0x60] sm:$0xff]
    %v100 = vld [vmem:[#allocation2 + $0x68] sm:$0xff]
    %v101 = vld [vmem:[#allocation2 + $0x70] sm:$0xff]
    %v102 = vld [vmem:[#allocation2 + $0x78] sm:$0xff]
    %v103 = vld [vmem:[#allocation2 + $0x80] sm:$0xff]
    %v104 = vld [vmem:[#allocation2 + $0x88] sm:$0xff]
    %v105 = vld [vmem:[#allocation2 + $0x90] sm:$0xff]
    %v106 = vld [vmem:[#allocation2 + $0x98] sm:$0xff]
    %v107 = vld [vmem:[#allocation2 + $0xa0] sm:$0xff]
    %v108 = vld [vmem:[#allocation2 + $0xa8] sm:$0xff]
    %v109 = vld [vmem:[#allocation2 + $0xb0] sm:$0xff]
    %v110 = vld [vmem:[#allocation2 + $0xb8] sm:$0xff]
    %v111 = vld [vmem:[#allocation2 + $0xc0] sm:$0xff]
    %v112 = vld [vmem:[#allocation2 + $0xc8] sm:$0xff]
    %v113 = vld [vmem:[#allocation2 + $0xd0] sm:$0xff]
    %v114 = vld [vmem:[#allocation2 + $0xd8] sm:$0xff]
    %v115 = vld [vmem:[#allocation2 + $0xe0] sm:$0xff]
    %v116 = vld [vmem:[#allocation2 + $0xe8] sm:$0xff]
    %v117 = vld [vmem:[#allocation2 + $0xf0] sm:$0xff]
    %v118 = vld [vmem:[#allocation2 + $0xf8] sm:$0xff]
    %v119 = vld [vmem:[#allocation2 + $0x100] sm:$0xff]
    %v120 = vld [vmem:[#allocation2 + $0x108] sm:$0xff]
    %v121 = vld [vmem:[#allocation2 + $0x110] sm:$0xff]
    %v122 = vld [vmem:[#allocation2 + $0x118] sm:$0xff]
    %v123 = vld [vmem:[#allocation2 + $0x120] sm:$0xff]
    %v124 = vld [vmem:[#allocation2 + $0x128] sm:$0xff]
    %v125 = vld [vmem:[#allocation2 + $0x130] sm:$0xff]
    %v126 = vld [vmem:[#allocation2 + $0x138] sm:$0xff]
    %v127 = vld [vmem:[#allocation2 + $0x140] sm:$0xff]
    %v128 = vld [vmem:[#allocation2 + $0x148] sm:$0xff]
    %v129 = vld [vmem:[#allocation2 + $0x150] sm:$0xff]
    %v130 = vld [vmem:[#allocation2 + $0x158] sm:$0xff]
    %v131 = vld [vmem:[#allocation2 + $0x160] sm:$0xff]
    %v132 = vld [vmem:[#allocation2 + $0x168] sm:$0xff]
    %v133 = vld [vmem:[#allocation2 + $0x170] sm:$0xff]
    %v134 = vld [vmem:[#allocation2 + $0x178] sm:$0xff]
    %v135 = vld [vmem:[#allocation2 + $0x180] sm:$0xff]
    %v136 = vld [vmem:[#allocation2 + $0x188] sm:$0xff]
    %v137 = vld [vmem:[#allocation2 + $0x190] sm:$0xff]
    %v138 = vld [vmem:[#allocation2 + $0x198] sm:$0xff]
    %v139 = vld [vmem:[#allocation2 + $0x1a0] sm:$0xff]
    %v140 = vld [vmem:[#allocation2 + $0x1a8] sm:$0xff]
    %v141 = vld [vmem:[#allocation2 + $0x1b0] sm:$0xff]
    %v142 = vld [vmem:[#allocation2 + $0x1b8] sm:$0xff]
    %v143 = vld [vmem:[#allocation2 + $0x1c0] sm:$0xff]
    %v144 = vld [vmem:[#allocation2 + $0x1c8] sm:$0xff]
    %v145 = vld [vmem:[#allocation2 + $0x1d0] sm:$0xff]
    %v146 = vld [vmem:[#allocation2 + $0x1d8] sm:$0xff]
    %v147 = vld [vmem:[#allocation2 + $0x1e0] sm:$0xff]
    %v148 = vld [vmem:[#allocation2 + $0x1e8] sm:$0xff]
    %v149 = vld [vmem:[#allocation2 + $0x1f0] sm:$0xff]
    %v150 = vld [vmem:[#allocation2 + $0x1f8] sm:$0xff]
    %151 = vmatpush.msra.mxu0 %v147
    %152 = vmatpush.msra.mxu0 %v143
    %153 = vmatpush.msra.mxu0 %v139
    %154 = vmatpush.msra.mxu0 %v135
    %155 = vmatpush.msra.mxu0 %v131
    %156 = vmatpush.msra.mxu0 %v127
    %157 = vmatpush.msra.mxu0 %v123
    %158 = vmatpush.msra.mxu0 %v119
    %159 = vmatpush.msra.mxu0 %v115
    %160 = vmatpush.msra.mxu0 %v111
    %161 = vmatpush.msra.mxu0 %v107
    %162 = vmatpush.msra.mxu0 %v103
    %163 = vmatpush.msra.mxu0 %v99
    %164 = vmatpush.msra.mxu0 %v95
    %165 = vmatpush.msra.mxu0 %v91
    %166 = vmatpush.msra.mxu0 %v87
    %167 = vmatmul.f32.gmra.mxu0 %v83
    %v168 = vpop.f32.mrf.mxu0
    %v169 = vadd.f32 0.0, %v168
    %170 = vmatmul.f32.gmra.mxu0 %v84
    %v171 = vpop.f32.mrf.mxu0
    %v172 = vadd.f32 0.0, %v171
    %173 = vmatmul.f32.gmra.mxu0 %v85
    %v174 = vpop.f32.mrf.mxu0
    %v175 = vadd.f32 0.0, %v174
    %176 = vmatmul.f32.gmra.mxu0 %v86
    %v177 = vpop.f32.mrf.mxu0
    %v178 = vadd.f32 0.0, %v177
    %179 = vdwg.mxu0
    %180 = vmatpush.msra.mxu0 %v148
    %181 = vmatpush.msra.mxu0 %v144
    %182 = vmatpush.msra.mxu0 %v140
    %183 = vmatpush.msra.mxu0 %v136
    %184 = vmatpush.msra.mxu0 %v132
    %185 = vmatpush.msra.mxu0 %v128
    %186 = vmatpush.msra.mxu0 %v124
    %187 = vmatpush.msra.mxu0 %v120
    %188 = vmatpush.msra.mxu0 %v116
    %189 = vmatpush.msra.mxu0 %v112
    %190 = vmatpush.msra.mxu0 %v108
    %191 = vmatpush.msra.mxu0 %v104
    %192 = vmatpush.msra.mxu0 %v100
    %193 = vmatpush.msra.mxu0 %v96
    %194 = vmatpush.msra.mxu0 %v92
    %195 = vmatpush.msra.mxu0 %v88
    %196 = vmatmul.f32.gmra.mxu0 %v83
    %v197 = vpop.f32.mrf.mxu0
    %v198 = vadd.f32 0.0, %v197
    %199 = vmatmul.f32.gmra.mxu0 %v84
    %v200 = vpop.f32.mrf.mxu0
    %v201 = vadd.f32 0.0, %v200
    %202 = vmatmul.f32.gmra.mxu0 %v85
    %v203 = vpop.f32.mrf.mxu0
    %v204 = vadd.f32 0.0, %v203
    %205 = vmatmul.f32.gmra.mxu0 %v86
    %v206 = vpop.f32.mrf.mxu0
    %v207 = vadd.f32 0.0, %v206
    %208 = vdwg.mxu0
    %209 = vmatpush.msra.mxu0 %v149
    %210 = vmatpush.msra.mxu0 %v145
    %211 = vmatpush.msra.mxu0 %v141
    %212 = vmatpush.msra.mxu0 %v137
    %213 = vmatpush.msra.mxu0 %v133
    %214 = vmatpush.msra.mxu0 %v129
    %215 = vmatpush.msra.mxu0 %v125
    %216 = vmatpush.msra.mxu0 %v121
    %217 = vmatpush.msra.mxu0 %v117
    %218 = vmatpush.msra.mxu0 %v113
    %219 = vmatpush.msra.mxu0 %v109
    %220 = vmatpush.msra.mxu0 %v105
    %221 = vmatpush.msra.mxu0 %v101
    %222 = vmatpush.msra.mxu0 %v97
    %223 = vmatpush.msra.mxu0 %v93
    %224 = vmatpush.msra.mxu0 %v89
    %225 = vmatmul.f32.gmra.mxu0 %v83
    %v226 = vpop.f32.mrf.mxu0
    %v227 = vadd.f32 0.0, %v226
    %228 = vmatmul.f32.gmra.mxu0 %v84
    %v229 = vpop.f32.mrf.mxu0
    %v230 = vadd.f32 0.0, %v229
    %231 = vmatmul.f32.gmra.mxu0 %v85
    %v232 = vpop.f32.mrf.mxu0
    %v233 = vadd.f32 0.0, %v232
    %234 = vmatmul.f32.gmra.mxu0 %v86
    %v235 = vpop.f32.mrf.mxu0
    %v236 = vadd.f32 0.0, %v235
    %237 = vdwg.mxu0
    %238 = vmatpush.msra.mxu0 %v150
    %239 = vmatpush.msra.mxu0 %v146
    %240 = vmatpush.msra.mxu0 %v142
    %241 = vmatpush.msra.mxu0 %v138
    %242 = vmatpush.msra.mxu0 %v134
    %243 = vmatpush.msra.mxu0 %v130
    %244 = vmatpush.msra.mxu0 %v126
    %245 = vmatpush.msra.mxu0 %v122
    %246 = vmatpush.msra.mxu0 %v118
    %247 = vmatpush.msra.mxu0 %v114
    %248 = vmatpush.msra.mxu0 %v110
    %249 = vmatpush.msra.mxu0 %v106
    %250 = vmatpush.msra.mxu0 %v102
    %251 = vmatpush.msra.mxu0 %v98
    %252 = vmatpush.msra.mxu0 %v94
    %253 = vmatpush.msra.mxu0 %v90
    %254 = vmatmul.f32.gmra.mxu0 %v83
    %v255 = vpop.f32.mrf.mxu0
    %v256 = vadd.f32 0.0, %v255
    %257 = vmatmul.f32.gmra.mxu0 %v84
    %v258 = vpop.f32.mrf.mxu0
    %v259 = vadd.f32 0.0, %v258
    %260 = vmatmul.f32.gmra.mxu0 %v85
    %v261 = vpop.f32.mrf.mxu0
    %v262 = vadd.f32 0.0, %v261
    %263 = vmatmul.f32.gmra.mxu0 %v86
    %v264 = vpop.f32.mrf.mxu0
    %v265 = vadd.f32 0.0, %v264
    %266 = vdwg.mxu0
    %v267 = vperm.slane %v81, 0
    %v268 = vperm.slane %v82, 0
    %v269 = vadd.f32 %v169, %v267
    %v270 = vadd.f32 %v198, %v268
    %v271 = vadd.f32 %v172, %v267
    %v272 = vadd.f32 %v201, %v268
    %v273 = vadd.f32 %v175, %v267
    %v274 = vadd.f32 %v204, %v268
    %v275 = vadd.f32 %v178, %v267
    %v276 = vadd.f32 %v207, %v268
    %v277 = vmax.f32 %v269, 0.0
    %v278 = vmax.f32 %v270, 0.0
    %v279 = vmax.f32 %v271, 0.0
    %v280 = vmax.f32 %v272, 0.0
    %v281 = vmax.f32 %v273, 0.0
    %v282 = vmax.f32 %v274, 0.0
    %v283 = vmax.f32 %v275, 0.0
    %v284 = vmax.f32 %v276, 0.0
    %v285 = vld [vmem:[#allocation4] sm:$0xff]
    %v286 = vld [vmem:[#allocation4 + $0x8] sm:$0xff]
    %v287 = vld [vmem:[#allocation4 + $0x10] sm:$0xff]
    %v288 = vld [vmem:[#allocation4 + $0x18] sm:$0xff]
    %v289 = vld [vmem:[#allocation4 + $0x20] sm:$0xff]
    %v290 = vld [vmem:[#allocation4 + $0x28] sm:$0xff]
    %v291 = vld [vmem:[#allocation4 + $0x30] sm:$0xff]
    %v292 = vld [vmem:[#allocation4 + $0x38] sm:$0xff]
    %v293 = vld [vmem:[#allocation4 + $0x40] sm:$0xff]
    %v294 = vld [vmem:[#allocation4 + $0x48] sm:$0xff]
    %v295 = vld [vmem:[#allocation4 + $0x50] sm:$0xff]
    %v296 = vld [vmem:[#allocation4 + $0x58] sm:$0xff]
    %v297 = vld [vmem:[#allocation4 + $0x60] sm:$0xff]
    %v298 = vld [vmem:[#allocation4 + $0x68] sm:$0xff]
    %v299 = vld [vmem:[#allocation4 + $0x70] sm:$0xff]
    %v300 = vld [vmem:[#allocation4 + $0x78] sm:$0xff]
    %v301 = vld [vmem:[#allocation4 + $0x80] sm:$0xff]
    %v302 = vld [vmem:[#allocation4 + $0x88] sm:$0xff]
    %v303 = vld [vmem:[#allocation4 + $0x90] sm:$0xff]
    %v304 = vld [vmem:[#allocation4 + $0x98] sm:$0xff]
    %v305 = vld [vmem:[#allocation4 + $0xa0] sm:$0xff]
    %v306 = vld [vmem:[#allocation4 + $0xa8] sm:$0xff]
    %v307 = vld [vmem:[#allocation4 + $0xb0] sm:$0xff]
    %v308 = vld [vmem:[#allocation4 + $0xb8] sm:$0xff]
    %v309 = vld [vmem:[#allocation4 + $0xc0] sm:$0xff]
    %v310 = vld [vmem:[#allocation4 + $0xc8] sm:$0xff]
    %v311 = vld [vmem:[#allocation4 + $0xd0] sm:$0xff]
    %v312 = vld [vmem:[#allocation4 + $0xd8] sm:$0xff]
    %v313 = vld [vmem:[#allocation4 + $0xe0] sm:$0xff]
    %v314 = vld [vmem:[#allocation4 + $0xe8] sm:$0xff]
    %v315 = vld [vmem:[#allocation4 + $0xf0] sm:$0xff]
    %v316 = vld [vmem:[#allocation4 + $0xf8] sm:$0xff]
    %v317 = vld [vmem:[#allocation4 + $0x100] sm:$0xff]
    %v318 = vld [vmem:[#allocation4 + $0x108] sm:$0xff]
    %v319 = vld [vmem:[#allocation4 + $0x110] sm:$0xff]
    %v320 = vld [vmem:[#allocation4 + $0x118] sm:$0xff]
    %v321 = vld [vmem:[#allocation4 + $0x120] sm:$0xff]
    %v322 = vld [vmem:[#allocation4 + $0x128] sm:$0xff]
    %v323 = vld [vmem:[#allocation4 + $0x130] sm:$0xff]
    %v324 = vld [vmem:[#allocation4 + $0x138] sm:$0xff]
    %v325 = vld [vmem:[#allocation4 + $0x140] sm:$0xff]
    %v326 = vld [vmem:[#allocation4 + $0x148] sm:$0xff]
    %v327 = vld [vmem:[#allocation4 + $0x150] sm:$0xff]
    %v328 = vld [vmem:[#allocation4 + $0x158] sm:$0xff]
    %v329 = vld [vmem:[#allocation4 + $0x160] sm:$0xff]
    %v330 = vld [vmem:[#allocation4 + $0x168] sm:$0xff]
    %v331 = vld [vmem:[#allocation4 + $0x170] sm:$0xff]
    %v332 = vld [vmem:[#allocation4 + $0x178] sm:$0xff]
    %v333 = vld [vmem:[#allocation4 + $0x180] sm:$0xff]
    %v334 = vld [vmem:[#allocation4 + $0x188] sm:$0xff]
    %v335 = vld [vmem:[#allocation4 + $0x190] sm:$0xff]
    %v336 = vld [vmem:[#allocation4 + $0x198] sm:$0xff]
    %v337 = vld [vmem:[#allocation4 + $0x1a0] sm:$0xff]
    %v338 = vld [vmem:[#allocation4 + $0x1a8] sm:$0xff]
    %v339 = vld [vmem:[#allocation4 + $0x1b0] sm:$0xff]
    %v340 = vld [vmem:[#allocation4 + $0x1b8] sm:$0xff]
    %v341 = vld [vmem:[#allocation4 + $0x1c0] sm:$0xff]
    %v342 = vld [vmem:[#allocation4 + $0x1c8] sm:$0xff]
    %v343 = vld [vmem:[#allocation4 + $0x1d0] sm:$0xff]
    %v344 = vld [vmem:[#allocation4 + $0x1d8] sm:$0xff]
    %v345 = vld [vmem:[#allocation4 + $0x1e0] sm:$0xff]
    %v346 = vld [vmem:[#allocation4 + $0x1e8] sm:$0xff]
    %v347 = vld [vmem:[#allocation4 + $0x1f0] sm:$0xff]
    %v348 = vld [vmem:[#allocation4 + $0x1f8] sm:$0xff]
    %v349 = vperm.slane %v81, 1
    %v350 = vperm.slane %v82, 1
    %351 = vmatpush.msra.mxu0 %v315
    %352 = vmatpush.msra.mxu0 %v313
    %353 = vmatpush.msra.mxu0 %v311
    %354 = vmatpush.msra.mxu0 %v309
    %355 = vmatpush.msra.mxu0 %v307
    %356 = vmatpush.msra.mxu0 %v305
    %357 = vmatpush.msra.mxu0 %v303
    %358 = vmatpush.msra.mxu0 %v301
    %359 = vmatpush.msra.mxu0 %v299
    %360 = vmatpush.msra.mxu0 %v297
    %361 = vmatpush.msra.mxu0 %v295
    %362 = vmatpush.msra.mxu0 %v293
    %363 = vmatpush.msra.mxu0 %v291
    %364 = vmatpush.msra.mxu0 %v289
    %365 = vmatpush.msra.mxu0 %v287
    %366 = vmatpush.msra.mxu0 %v285
    %367 = vmatmul.f32.gmra.mxu0 %v277
    %v368 = vpop.f32.mrf.mxu0
    %v369 = vadd.f32 %v349, %v368
    %370 = vmatmul.f32.gmra.mxu0 %v279
    %v371 = vpop.f32.mrf.mxu0
    %v372 = vadd.f32 %v349, %v371
    %373 = vmatmul.f32.gmra.mxu0 %v281
    %v374 = vpop.f32.mrf.mxu0
    %v375 = vadd.f32 %v349, %v374
    %376 = vmatmul.f32.gmra.mxu0 %v283
    %v377 = vpop.f32.mrf.mxu0
    %v378 = vadd.f32 %v349, %v377
    %379 = vdwg.mxu0
    %380 = vmatpush.msra.mxu0 %v347
    %381 = vmatpush.msra.mxu0 %v345
    %382 = vmatpush.msra.mxu0 %v343
    %383 = vmatpush.msra.mxu0 %v341
    %384 = vmatpush.msra.mxu0 %v339
    %385 = vmatpush.msra.mxu0 %v337
    %386 = vmatpush.msra.mxu0 %v335
    %387 = vmatpush.msra.mxu0 %v333
    %388 = vmatpush.msra.mxu0 %v331
    %389 = vmatpush.msra.mxu0 %v329
    %390 = vmatpush.msra.mxu0 %v327
    %391 = vmatpush.msra.mxu0 %v325
    %392 = vmatpush.msra.mxu0 %v323
    %393 = vmatpush.msra.mxu0 %v321
    %394 = vmatpush.msra.mxu0 %v319
    %395 = vmatpush.msra.mxu0 %v317
    %396 = vmatmul.f32.gmra.mxu0 %v278
    %v397 = vpop.f32.mrf.mxu0
    %v398 = vadd.f32 %v369, %v397
    %399 = vmatmul.f32.gmra.mxu0 %v280
    %v400 = vpop.f32.mrf.mxu0
    %v401 = vadd.f32 %v372, %v400
    %402 = vmatmul.f32.gmra.mxu0 %v282
    %v403 = vpop.f32.mrf.mxu0
    %v404 = vadd.f32 %v375, %v403
    %405 = vmatmul.f32.gmra.mxu0 %v284
    %v406 = vpop.f32.mrf.mxu0
    %v407 = vadd.f32 %v378, %v406
    %408 = vdwg.mxu0
    %409 = vmatpush.msra.mxu0 %v316
    %410 = vmatpush.msra.mxu0 %v314
    %411 = vmatpush.msra.mxu0 %v312
    %412 = vmatpush.msra.mxu0 %v310
    %413 = vmatpush.msra.mxu0 %v308
    %414 = vmatpush.msra.mxu0 %v306
    %415 = vmatpush.msra.mxu0 %v304
    %416 = vmatpush.msra.mxu0 %v302
    %417 = vmatpush.msra.mxu0 %v300
    %418 = vmatpush.msra.mxu0 %v298
    %419 = vmatpush.msra.mxu0 %v296
    %420 = vmatpush.msra.mxu0 %v294
    %421 = vmatpush.msra.mxu0 %v292
    %422 = vmatpush.msra.mxu0 %v290
    %423 = vmatpush.msra.mxu0 %v288
    %424 = vmatpush.msra.mxu0 %v286
    %425 = vmatmul.f32.gmra.mxu0 %v277
    %v426 = vpop.f32.mrf.mxu0
    %v427 = vadd.f32 %v350, %v426
    %428 = vmatmul.f32.gmra.mxu0 %v279
    %v429 = vpop.f32.mrf.mxu0
    %v430 = vadd.f32 %v350, %v429
    %431 = vmatmul.f32.gmra.mxu0 %v281
    %v432 = vpop.f32.mrf.mxu0
    %v433 = vadd.f32 %v350, %v432
    %434 = vmatmul.f32.gmra.mxu0 %v283
    %v435 = vpop.f32.mrf.mxu0
    %v436 = vadd.f32 %v350, %v435
    %437 = vdwg.mxu0
    %438 = vmatpush.msra.mxu0 %v348
    %439 = vmatpush.msra.mxu0 %v346
    %440 = vmatpush.msra.mxu0 %v344
    %441 = vmatpush.msra.mxu0 %v342
    %442 = vmatpush.msra.mxu0 %v340
    %443 = vmatpush.msra.mxu0 %v338
    %444 = vmatpush.msra.mxu0 %v336
    %445 = vmatpush.msra.mxu0 %v334
    %446 = vmatpush.msra.mxu0 %v332
    %447 = vmatpush.msra.mxu0 %v330
    %448 = vmatpush.msra.mxu0 %v328
    %449 = vmatpush.msra.mxu0 %v326
    %450 = vmatpush.msra.mxu0 %v324
    %451 = vmatpush.msra.mxu0 %v322
    %452 = vmatpush.msra.mxu0 %v320
    %453 = vmatpush.msra.mxu0 %v318
    %454 = vmatmul.f32.gmra.mxu0 %v278
    %v455 = vpop.f32.mrf.mxu0
    %v456 = vadd.f32 %v427, %v455
    %457 = vmatmul.f32.gmra.mxu0 %v280
    %v458 = vpop.f32.mrf.mxu0
    %v459 = vadd.f32 %v430, %v458
    %460 = vmatmul.f32.gmra.mxu0 %v282
    %v461 = vpop.f32.mrf.mxu0
    %v462 = vadd.f32 %v433, %v461
    %463 = vmatmul.f32.gmra.mxu0 %v284
    %v464 = vpop.f32.mrf.mxu0
    %v465 = vadd.f32 %v436, %v464
    %466 = vdwg.mxu0
    %v467 = vmax.f32 %v398, 0.0
    %v468 = vmax.f32 %v456, 0.0
    %v469 = vmax.f32 %v401, 0.0
    %v470 = vmax.f32 %v459, 0.0
    %v471 = vmax.f32 %v404, 0.0
    %v472 = vmax.f32 %v462, 0.0
    %v473 = vmax.f32 %v407, 0.0
    %v474 = vmax.f32 %v465, 0.0
    %s475 = scalar_lea.vmem [#allocation4], 512
    %v476 = vld [vmem:[%s475] sm:$0xff]
    %v477 = vld [vmem:[%s475 + $0x8] sm:$0xff]
    %v478 = vld [vmem:[%s475 + $0x10] sm:$0xff]
    %v479 = vld [vmem:[%s475 + $0x18] sm:$0xff]
    %v480 = vld [vmem:[%s475 + $0x20] sm:$0xff]
    %v481 = vld [vmem:[%s475 + $0x28] sm:$0xff]
    %v482 = vld [vmem:[%s475 + $0x30] sm:$0xff]
    %v483 = vld [vmem:[%s475 + $0x38] sm:$0xff]
    %v484 = vld [vmem:[%s475 + $0x40] sm:$0xff]
    %v485 = vld [vmem:[%s475 + $0x48] sm:$0xff]
    %v486 = vld [vmem:[%s475 + $0x50] sm:$0xff]
    %v487 = vld [vmem:[%s475 + $0x58] sm:$0xff]
    %v488 = vld [vmem:[%s475 + $0x60] sm:$0xff]
    %v489 = vld [vmem:[%s475 + $0x68] sm:$0xff]
    %v490 = vld [vmem:[%s475 + $0x70] sm:$0xff]
    %v491 = vld [vmem:[%s475 + $0x78] sm:$0xff]
    %v492 = vld [vmem:[%s475 + $0x80] sm:$0xff]
    %v493 = vld [vmem:[%s475 + $0x88] sm:$0xff]
    %v494 = vld [vmem:[%s475 + $0x90] sm:$0xff]
    %v495 = vld [vmem:[%s475 + $0x98] sm:$0xff]
    %v496 = vld [vmem:[%s475 + $0xa0] sm:$0xff]
    %v497 = vld [vmem:[%s475 + $0xa8] sm:$0xff]
    %v498 = vld [vmem:[%s475 + $0xb0] sm:$0xff]
    %v499 = vld [vmem:[%s475 + $0xb8] sm:$0xff]
    %v500 = vld [vmem:[%s475 + $0xc0] sm:$0xff]
    %v501 = vld [vmem:[%s475 + $0xc8] sm:$0xff]
    %v502 = vld [vmem:[%s475 + $0xd0] sm:$0xff]
    %v503 = vld [vmem:[%s475 + $0xd8] sm:$0xff]
    %v504 = vld [vmem:[%s475 + $0xe0] sm:$0xff]
    %v505 = vld [vmem:[%s475 + $0xe8] sm:$0xff]
    %v506 = vld [vmem:[%s475 + $0xf0] sm:$0xff]
    %v507 = vld [vmem:[%s475 + $0xf8] sm:$0xff]
    %v508 = vld [vmem:[%s475 + $0x100] sm:$0xff]
    %v509 = vld [vmem:[%s475 + $0x108] sm:$0xff]
    %v510 = vld [vmem:[%s475 + $0x110] sm:$0xff]
    %v511 = vld [vmem:[%s475 + $0x118] sm:$0xff]
    %v512 = vld [vmem:[%s475 + $0x120] sm:$0xff]
    %v513 = vld [vmem:[%s475 + $0x128] sm:$0xff]
    %v514 = vld [vmem:[%s475 + $0x130] sm:$0xff]
    %v515 = vld [vmem:[%s475 + $0x138] sm:$0xff]
    %v516 = vld [vmem:[%s475 + $0x140] sm:$0xff]
    %v517 = vld [vmem:[%s475 + $0x148] sm:$0xff]
    %v518 = vld [vmem:[%s475 + $0x150] sm:$0xff]
    %v519 = vld [vmem:[%s475 + $0x158] sm:$0xff]
    %v520 = vld [vmem:[%s475 + $0x160] sm:$0xff]
    %v521 = vld [vmem:[%s475 + $0x168] sm:$0xff]
    %v522 = vld [vmem:[%s475 + $0x170] sm:$0xff]
    %v523 = vld [vmem:[%s475 + $0x178] sm:$0xff]
    %v524 = vld [vmem:[%s475 + $0x180] sm:$0xff]
    %v525 = vld [vmem:[%s475 + $0x188] sm:$0xff]
    %v526 = vld [vmem:[%s475 + $0x190] sm:$0xff]
    %v527 = vld [vmem:[%s475 + $0x198] sm:$0xff]
    %v528 = vld [vmem:[%s475 + $0x1a0] sm:$0xff]
    %v529 = vld [vmem:[%s475 + $0x1a8] sm:$0xff]
    %v530 = vld [vmem:[%s475 + $0x1b0] sm:$0xff]
    %v531 = vld [vmem:[%s475 + $0x1b8] sm:$0xff]
    %v532 = vld [vmem:[%s475 + $0x1c0] sm:$0xff]
    %v533 = vld [vmem:[%s475 + $0x1c8] sm:$0xff]
    %v534 = vld [vmem:[%s475 + $0x1d0] sm:$0xff]
    %v535 = vld [vmem:[%s475 + $0x1d8] sm:$0xff]
    %v536 = vld [vmem:[%s475 + $0x1e0] sm:$0xff]
    %v537 = vld [vmem:[%s475 + $0x1e8] sm:$0xff]
    %v538 = vld [vmem:[%s475 + $0x1f0] sm:$0xff]
    %v539 = vld [vmem:[%s475 + $0x1f8] sm:$0xff]
    %v540 = vperm.slane %v81, 2
    %v541 = vperm.slane %v82, 2
    %542 = vmatpush.msra.mxu0 %v506
    %543 = vmatpush.msra.mxu0 %v504
    %544 = vmatpush.msra.mxu0 %v502
    %545 = vmatpush.msra.mxu0 %v500
    %546 = vmatpush.msra.mxu0 %v498
    %547 = vmatpush.msra.mxu0 %v496
    %548 = vmatpush.msra.mxu0 %v494
    %549 = vmatpush.msra.mxu0 %v492
    %550 = vmatpush.msra.mxu0 %v490
    %551 = vmatpush.msra.mxu0 %v488
    %552 = vmatpush.msra.mxu0 %v486
    %553 = vmatpush.msra.mxu0 %v484
    %554 = vmatpush.msra.mxu0 %v482
    %555 = vmatpush.msra.mxu0 %v480
    %556 = vmatpush.msra.mxu0 %v478
    %557 = vmatpush.msra.mxu0 %v476
    %558 = vmatmul.f32.gmra.mxu0 %v467
    %v559 = vpop.f32.mrf.mxu0
    %v560 = vadd.f32 %v540, %v559
    %561 = vmatmul.f32.gmra.mxu0 %v469
    %v562 = vpop.f32.mrf.mxu0
    %v563 = vadd.f32 %v540, %v562
    %564 = vmatmul.f32.gmra.mxu0 %v471
    %v565 = vpop.f32.mrf.mxu0
    %v566 = vadd.f32 %v540, %v565
    %567 = vmatmul.f32.gmra.mxu0 %v473
    %v568 = vpop.f32.mrf.mxu0
    %v569 = vadd.f32 %v540, %v568
    %570 = vdwg.mxu0
    %571 = vmatpush.msra.mxu0 %v538
    %572 = vmatpush.msra.mxu0 %v536
    %573 = vmatpush.msra.mxu0 %v534
    %574 = vmatpush.msra.mxu0 %v532
    %575 = vmatpush.msra.mxu0 %v530
    %576 = vmatpush.msra.mxu0 %v528
    %577 = vmatpush.msra.mxu0 %v526
    %578 = vmatpush.msra.mxu0 %v524
    %579 = vmatpush.msra.mxu0 %v522
    %580 = vmatpush.msra.mxu0 %v520
    %581 = vmatpush.msra.mxu0 %v518
    %582 = vmatpush.msra.mxu0 %v516
    %583 = vmatpush.msra.mxu0 %v514
    %584 = vmatpush.msra.mxu0 %v512
    %585 = vmatpush.msra.mxu0 %v510
    %586 = vmatpush.msra.mxu0 %v508
    %587 = vmatmul.f32.gmra.mxu0 %v468
    %v588 = vpop.f32.mrf.mxu0
    %v589 = vadd.f32 %v560, %v588
    %590 = vmatmul.f32.gmra.mxu0 %v470
    %v591 = vpop.f32.mrf.mxu0
    %v592 = vadd.f32 %v563, %v591
    %593 = vmatmul.f32.gmra.mxu0 %v472
    %v594 = vpop.f32.mrf.mxu0
    %v595 = vadd.f32 %v566, %v594
    %596 = vmatmul.f32.gmra.mxu0 %v474
    %v597 = vpop.f32.mrf.mxu0
    %v598 = vadd.f32 %v569, %v597
    %599 = vdwg.mxu0
    %600 = vmatpush.msra.mxu0 %v507
    %601 = vmatpush.msra.mxu0 %v505
    %602 = vmatpush.msra.mxu0 %v503
    %603 = vmatpush.msra.mxu0 %v501
    %604 = vmatpush.msra.mxu0 %v499
    %605 = vmatpush.msra.mxu0 %v497
    %606 = vmatpush.msra.mxu0 %v495
    %607 = vmatpush.msra.mxu0 %v493
    %608 = vmatpush.msra.mxu0 %v491
    %609 = vmatpush.msra.mxu0 %v489
    %610 = vmatpush.msra.mxu0 %v487
    %611 = vmatpush.msra.mxu0 %v485
    %612 = vmatpush.msra.mxu0 %v483
    %613 = vmatpush.msra.mxu0 %v481
    %614 = vmatpush.msra.mxu0 %v479
    %615 = vmatpush.msra.mxu0 %v477
    %616 = vmatmul.f32.gmra.mxu0 %v467
    %v617 = vpop.f32.mrf.mxu0
    %v618 = vadd.f32 %v541, %v617
    %619 = vmatmul.f32.gmra.mxu0 %v469
    %v620 = vpop.f32.mrf.mxu0
    %v621 = vadd.f32 %v541, %v620
    %622 = vmatmul.f32.gmra.mxu0 %v471
    %v623 = vpop.f32.mrf.mxu0
    %v624 = vadd.f32 %v541, %v623
    %625 = vmatmul.f32.gmra.mxu0 %v473
    %v626 = vpop.f32.mrf.mxu0
    %v627 = vadd.f32 %v541, %v626
    %628 = vdwg.mxu0
    %629 = vmatpush.msra.mxu0 %v539
    %630 = vmatpush.msra.mxu0 %v537
    %631 = vmatpush.msra.mxu0 %v535
    %632 = vmatpush.msra.mxu0 %v533
    %633 = vmatpush.msra.mxu0 %v531
    %634 = vmatpush.msra.mxu0 %v529
    %635 = vmatpush.msra.mxu0 %v527
    %636 = vmatpush.msra.mxu0 %v525
    %637 = vmatpush.msra.mxu0 %v523
    %638 = vmatpush.msra.mxu0 %v521
    %639 = vmatpush.msra.mxu0 %v519
    %640 = vmatpush.msra.mxu0 %v517
    %641 = vmatpush.msra.mxu0 %v515
    %642 = vmatpush.msra.mxu0 %v513
    %643 = vmatpush.msra.mxu0 %v511
    %644 = vmatpush.msra.mxu0 %v509
    %645 = vmatmul.f32.gmra.mxu0 %v468
    %v646 = vpop.f32.mrf.mxu0
    %v647 = vadd.f32 %v618, %v646
    %648 = vmatmul.f32.gmra.mxu0 %v470
    %v649 = vpop.f32.mrf.mxu0
    %v650 = vadd.f32 %v621, %v649
    %651 = vmatmul.f32.gmra.mxu0 %v472
    %v652 = vpop.f32.mrf.mxu0
    %v653 = vadd.f32 %v624, %v652
    %654 = vmatmul.f32.gmra.mxu0 %v474
    %v655 = vpop.f32.mrf.mxu0
    %v656 = vadd.f32 %v627, %v655
    %657 = vdwg.mxu0
    %v658 = vmax.f32 %v589, 0.0
    %v659 = vmax.f32 %v647, 0.0
    %v660 = vmax.f32 %v592, 0.0
    %v661 = vmax.f32 %v650, 0.0
    %v662 = vmax.f32 %v595, 0.0
    %v663 = vmax.f32 %v653, 0.0
    %v664 = vmax.f32 %v598, 0.0
    %v665 = vmax.f32 %v656, 0.0
    %s666 = scalar_lea.vmem [#allocation4], 1024
    %v667 = vld [vmem:[%s666] sm:$0xff]
    %v668 = vld [vmem:[%s666 + $0x8] sm:$0xff]
    %v669 = vld [vmem:[%s666 + $0x10] sm:$0xff]
    %v670 = vld [vmem:[%s666 + $0x18] sm:$0xff]
    %v671 = vld [vmem:[%s666 + $0x20] sm:$0xff]
    %v672 = vld [vmem:[%s666 + $0x28] sm:$0xff]
    %v673 = vld [vmem:[%s666 + $0x30] sm:$0xff]
    %v674 = vld [vmem:[%s666 + $0x38] sm:$0xff]
    %v675 = vld [vmem:[%s666 + $0x40] sm:$0xff]
    %v676 = vld [vmem:[%s666 + $0x48] sm:$0xff]
    %v677 = vld [vmem:[%s666 + $0x50] sm:$0xff]
    %v678 = vld [vmem:[%s666 + $0x58] sm:$0xff]
    %v679 = vld [vmem:[%s666 + $0x60] sm:$0xff]
    %v680 = vld [vmem:[%s666 + $0x68] sm:$0xff]
    %v681 = vld [vmem:[%s666 + $0x70] sm:$0xff]
    %v682 = vld [vmem:[%s666 + $0x78] sm:$0xff]
    %v683 = vld [vmem:[%s666 + $0x80] sm:$0xff]
    %v684 = vld [vmem:[%s666 + $0x88] sm:$0xff]
    %v685 = vld [vmem:[%s666 + $0x90] sm:$0xff]
    %v686 = vld [vmem:[%s666 + $0x98] sm:$0xff]
    %v687 = vld [vmem:[%s666 + $0xa0] sm:$0xff]
    %v688 = vld [vmem:[%s666 + $0xa8] sm:$0xff]
    %v689 = vld [vmem:[%s666 + $0xb0] sm:$0xff]
    %v690 = vld [vmem:[%s666 + $0xb8] sm:$0xff]
    %v691 = vld [vmem:[%s666 + $0xc0] sm:$0xff]
    %v692 = vld [vmem:[%s666 + $0xc8] sm:$0xff]
    %v693 = vld [vmem:[%s666 + $0xd0] sm:$0xff]
    %v694 = vld [vmem:[%s666 + $0xd8] sm:$0xff]
    %v695 = vld [vmem:[%s666 + $0xe0] sm:$0xff]
    %v696 = vld [vmem:[%s666 + $0xe8] sm:$0xff]
    %v697 = vld [vmem:[%s666 + $0xf0] sm:$0xff]
    %v698 = vld [vmem:[%s666 + $0xf8] sm:$0xff]
    %v699 = vld [vmem:[%s666 + $0x100] sm:$0xff]
    %v700 = vld [vmem:[%s666 + $0x108] sm:$0xff]
    %v701 = vld [vmem:[%s666 + $0x110] sm:$0xff]
    %v702 = vld [vmem:[%s666 + $0x118] sm:$0xff]
    %v703 = vld [vmem:[%s666 + $0x120] sm:$0xff]
    %v704 = vld [vmem:[%s666 + $0x128] sm:$0xff]
    %v705 = vld [vmem:[%s666 + $0x130] sm:$0xff]
    %v706 = vld [vmem:[%s666 + $0x138] sm:$0xff]
    %v707 = vld [vmem:[%s666 + $0x140] sm:$0xff]
    %v708 = vld [vmem:[%s666 + $0x148] sm:$0xff]
    %v709 = vld [vmem:[%s666 + $0x150] sm:$0xff]
    %v710 = vld [vmem:[%s666 + $0x158] sm:$0xff]
    %v711 = vld [vmem:[%s666 + $0x160] sm:$0xff]
    %v712 = vld [vmem:[%s666 + $0x168] sm:$0xff]
    %v713 = vld [vmem:[%s666 + $0x170] sm:$0xff]
    %v714 = vld [vmem:[%s666 + $0x178] sm:$0xff]
    %v715 = vld [vmem:[%s666 + $0x180] sm:$0xff]
    %v716 = vld [vmem:[%s666 + $0x188] sm:$0xff]
    %v717 = vld [vmem:[%s666 + $0x190] sm:$0xff]
    %v718 = vld [vmem:[%s666 + $0x198] sm:$0xff]
    %v719 = vld [vmem:[%s666 + $0x1a0] sm:$0xff]
    %v720 = vld [vmem:[%s666 + $0x1a8] sm:$0xff]
    %v721 = vld [vmem:[%s666 + $0x1b0] sm:$0xff]
    %v722 = vld [vmem:[%s666 + $0x1b8] sm:$0xff]
    %v723 = vld [vmem:[%s666 + $0x1c0] sm:$0xff]
    %v724 = vld [vmem:[%s666 + $0x1c8] sm:$0xff]
    %v725 = vld [vmem:[%s666 + $0x1d0] sm:$0xff]
    %v726 = vld [vmem:[%s666 + $0x1d8] sm:$0xff]
    %v727 = vld [vmem:[%s666 + $0x1e0] sm:$0xff]
    %v728 = vld [vmem:[%s666 + $0x1e8] sm:$0xff]
    %v729 = vld [vmem:[%s666 + $0x1f0] sm:$0xff]
    %v730 = vld [vmem:[%s666 + $0x1f8] sm:$0xff]
    %v731 = vperm.slane %v81, 3
    %v732 = vperm.slane %v82, 3
    %733 = vmatpush.msra.mxu0 %v697
    %734 = vmatpush.msra.mxu0 %v695
    %735 = vmatpush.msra.mxu0 %v693
    %736 = vmatpush.msra.mxu0 %v691
    %737 = vmatpush.msra.mxu0 %v689
    %738 = vmatpush.msra.mxu0 %v687
    %739 = vmatpush.msra.mxu0 %v685
    %740 = vmatpush.msra.mxu0 %v683
    %741 = vmatpush.msra.mxu0 %v681
    %742 = vmatpush.msra.mxu0 %v679
    %743 = vmatpush.msra.mxu0 %v677
    %744 = vmatpush.msra.mxu0 %v675
    %745 = vmatpush.msra.mxu0 %v673
    %746 = vmatpush.msra.mxu0 %v671
    %747 = vmatpush.msra.mxu0 %v669
    %748 = vmatpush.msra.mxu0 %v667
    %749 = vmatmul.f32.gmra.mxu0 %v658
    %v750 = vpop.f32.mrf.mxu0
    %v751 = vadd.f32 %v731, %v750
    %752 = vmatmul.f32.gmra.mxu0 %v660
    %v753 = vpop.f32.mrf.mxu0
    %v754 = vadd.f32 %v731, %v753
    %755 = vmatmul.f32.gmra.mxu0 %v662
    %v756 = vpop.f32.mrf.mxu0
    %v757 = vadd.f32 %v731, %v756
    %758 = vmatmul.f32.gmra.mxu0 %v664
    %v759 = vpop.f32.mrf.mxu0
    %v760 = vadd.f32 %v731, %v759
    %761 = vdwg.mxu0
    %762 = vmatpush.msra.mxu0 %v729
    %763 = vmatpush.msra.mxu0 %v727
    %764 = vmatpush.msra.mxu0 %v725
    %765 = vmatpush.msra.mxu0 %v723
    %766 = vmatpush.msra.mxu0 %v721
    %767 = vmatpush.msra.mxu0 %v719
    %768 = vmatpush.msra.mxu0 %v717
    %769 = vmatpush.msra.mxu0 %v715
    %770 = vmatpush.msra.mxu0 %v713
    %771 = vmatpush.msra.mxu0 %v711
    %772 = vmatpush.msra.mxu0 %v709
    %773 = vmatpush.msra.mxu0 %v707
    %774 = vmatpush.msra.mxu0 %v705
    %775 = vmatpush.msra.mxu0 %v703
    %776 = vmatpush.msra.mxu0 %v701
    %777 = vmatpush.msra.mxu0 %v699
    %778 = vmatmul.f32.gmra.mxu0 %v659
    %v779 = vpop.f32.mrf.mxu0
    %v780 = vadd.f32 %v751, %v779
    %781 = vmatmul.f32.gmra.mxu0 %v661
    %v782 = vpop.f32.mrf.mxu0
    %v783 = vadd.f32 %v754, %v782
    %784 = vmatmul.f32.gmra.mxu0 %v663
    %v785 = vpop.f32.mrf.mxu0
    %v786 = vadd.f32 %v757, %v785
    %787 = vmatmul.f32.gmra.mxu0 %v665
    %v788 = vpop.f32.mrf.mxu0
    %v789 = vadd.f32 %v760, %v788
    %790 = vdwg.mxu0
    %791 = vmatpush.msra.mxu0 %v698
    %792 = vmatpush.msra.mxu0 %v696
    %793 = vmatpush.msra.mxu0 %v694
    %794 = vmatpush.msra.mxu0 %v692
    %795 = vmatpush.msra.mxu0 %v690
    %796 = vmatpush.msra.mxu0 %v688
    %797 = vmatpush.msra.mxu0 %v686
    %798 = vmatpush.msra.mxu0 %v684
    %799 = vmatpush.msra.mxu0 %v682
    %800 = vmatpush.msra.mxu0 %v680
    %801 = vmatpush.msra.mxu0 %v678
    %802 = vmatpush.msra.mxu0 %v676
    %803 = vmatpush.msra.mxu0 %v674
    %804 = vmatpush.msra.mxu0 %v672
    %805 = vmatpush.msra.mxu0 %v670
    %806 = vmatpush.msra.mxu0 %v668
    %807 = vmatmul.f32.gmra.mxu0 %v658
    %v808 = vpop.f32.mrf.mxu0
    %v809 = vadd.f32 %v732, %v808
    %810 = vmatmul.f32.gmra.mxu0 %v660
    %v811 = vpop.f32.mrf.mxu0
    %v812 = vadd.f32 %v732, %v811
    %813 = vmatmul.f32.gmra.mxu0 %v662
    %v814 = vpop.f32.mrf.mxu0
    %v815 = vadd.f32 %v732, %v814
    %816 = vmatmul.f32.gmra.mxu0 %v664
    %v817 = vpop.f32.mrf.mxu0
    %v818 = vadd.f32 %v732, %v817
    %819 = vdwg.mxu0
    %820 = vmatpush.msra.mxu0 %v730
    %821 = vmatpush.msra.mxu0 %v728
    %822 = vmatpush.msra.mxu0 %v726
    %823 = vmatpush.msra.mxu0 %v724
    %824 = vmatpush.msra.mxu0 %v722
    %825 = vmatpush.msra.mxu0 %v720
    %826 = vmatpush.msra.mxu0 %v718
    %827 = vmatpush.msra.mxu0 %v716
    %828 = vmatpush.msra.mxu0 %v714
    %829 = vmatpush.msra.mxu0 %v712
    %830 = vmatpush.msra.mxu0 %v710
    %831 = vmatpush.msra.mxu0 %v708
    %832 = vmatpush.msra.mxu0 %v706
    %833 = vmatpush.msra.mxu0 %v704
    %834 = vmatpush.msra.mxu0 %v702
    %835 = vmatpush.msra.mxu0 %v700
    %836 = vmatmul.f32.gmra.mxu0 %v659
    %v837 = vpop.f32.mrf.mxu0
    %v838 = vadd.f32 %v809, %v837
    %839 = vmatmul.f32.gmra.mxu0 %v661
    %v840 = vpop.f32.mrf.mxu0
    %v841 = vadd.f32 %v812, %v840
    %842 = vmatmul.f32.gmra.mxu0 %v663
    %v843 = vpop.f32.mrf.mxu0
    %v844 = vadd.f32 %v815, %v843
    %845 = vmatmul.f32.gmra.mxu0 %v665
    %v846 = vpop.f32.mrf.mxu0
    %v847 = vadd.f32 %v818, %v846
    %848 = vdwg.mxu0
    %v849 = vmax.f32 %v780, 0.0
    %v850 = vmax.f32 %v838, 0.0
    %v851 = vmax.f32 %v783, 0.0
    %v852 = vmax.f32 %v841, 0.0
    %v853 = vmax.f32 %v786, 0.0
    %v854 = vmax.f32 %v844, 0.0
    %v855 = vmax.f32 %v789, 0.0
    %v856 = vmax.f32 %v847, 0.0
    %s857 = scalar_lea.vmem [#allocation4], 1536
    %v858 = vld [vmem:[%s857] sm:$0xff]
    %v859 = vld [vmem:[%s857 + $0x8] sm:$0xff]
    %v860 = vld [vmem:[%s857 + $0x10] sm:$0xff]
    %v861 = vld [vmem:[%s857 + $0x18] sm:$0xff]
    %v862 = vld [vmem:[%s857 + $0x20] sm:$0xff]
    %v863 = vld [vmem:[%s857 + $0x28] sm:$0xff]
    %v864 = vld [vmem:[%s857 + $0x30] sm:$0xff]
    %v865 = vld [vmem:[%s857 + $0x38] sm:$0xff]
    %v866 = vld [vmem:[%s857 + $0x40] sm:$0xff]
    %v867 = vld [vmem:[%s857 + $0x48] sm:$0xff]
    %v868 = vld [vmem:[%s857 + $0x50] sm:$0xff]
    %v869 = vld [vmem:[%s857 + $0x58] sm:$0xff]
    %v870 = vld [vmem:[%s857 + $0x60] sm:$0xff]
    %v871 = vld [vmem:[%s857 + $0x68] sm:$0xff]
    %v872 = vld [vmem:[%s857 + $0x70] sm:$0xff]
    %v873 = vld [vmem:[%s857 + $0x78] sm:$0xff]
    %v874 = vld [vmem:[%s857 + $0x80] sm:$0xff]
    %v875 = vld [vmem:[%s857 + $0x88] sm:$0xff]
    %v876 = vld [vmem:[%s857 + $0x90] sm:$0xff]
    %v877 = vld [vmem:[%s857 + $0x98] sm:$0xff]
    %v878 = vld [vmem:[%s857 + $0xa0] sm:$0xff]
    %v879 = vld [vmem:[%s857 + $0xa8] sm:$0xff]
    %v880 = vld [vmem:[%s857 + $0xb0] sm:$0xff]
    %v881 = vld [vmem:[%s857 + $0xb8] sm:$0xff]
    %v882 = vld [vmem:[%s857 + $0xc0] sm:$0xff]
    %v883 = vld [vmem:[%s857 + $0xc8] sm:$0xff]
    %v884 = vld [vmem:[%s857 + $0xd0] sm:$0xff]
    %v885 = vld [vmem:[%s857 + $0xd8] sm:$0xff]
    %v886 = vld [vmem:[%s857 + $0xe0] sm:$0xff]
    %v887 = vld [vmem:[%s857 + $0xe8] sm:$0xff]
    %v888 = vld [vmem:[%s857 + $0xf0] sm:$0xff]
    %v889 = vld [vmem:[%s857 + $0xf8] sm:$0xff]
    %v890 = vld [vmem:[%s857 + $0x100] sm:$0xff]
    %v891 = vld [vmem:[%s857 + $0x108] sm:$0xff]
    %v892 = vld [vmem:[%s857 + $0x110] sm:$0xff]
    %v893 = vld [vmem:[%s857 + $0x118] sm:$0xff]
    %v894 = vld [vmem:[%s857 + $0x120] sm:$0xff]
    %v895 = vld [vmem:[%s857 + $0x128] sm:$0xff]
    %v896 = vld [vmem:[%s857 + $0x130] sm:$0xff]
    %v897 = vld [vmem:[%s857 + $0x138] sm:$0xff]
    %v898 = vld [vmem:[%s857 + $0x140] sm:$0xff]
    %v899 = vld [vmem:[%s857 + $0x148] sm:$0xff]
    %v900 = vld [vmem:[%s857 + $0x150] sm:$0xff]
    %v901 = vld [vmem:[%s857 + $0x158] sm:$0xff]
    %v902 = vld [vmem:[%s857 + $0x160] sm:$0xff]
    %v903 = vld [vmem:[%s857 + $0x168] sm:$0xff]
    %v904 = vld [vmem:[%s857 + $0x170] sm:$0xff]
    %v905 = vld [vmem:[%s857 + $0x178] sm:$0xff]
    %v906 = vld [vmem:[%s857 + $0x180] sm:$0xff]
    %v907 = vld [vmem:[%s857 + $0x188] sm:$0xff]
    %v908 = vld [vmem:[%s857 + $0x190] sm:$0xff]
    %v909 = vld [vmem:[%s857 + $0x198] sm:$0xff]
    %v910 = vld [vmem:[%s857 + $0x1a0] sm:$0xff]
    %v911 = vld [vmem:[%s857 + $0x1a8] sm:$0xff]
    %v912 = vld [vmem:[%s857 + $0x1b0] sm:$0xff]
    %v913 = vld [vmem:[%s857 + $0x1b8] sm:$0xff]
    %v914 = vld [vmem:[%s857 + $0x1c0] sm:$0xff]
    %v915 = vld [vmem:[%s857 + $0x1c8] sm:$0xff]
    %v916 = vld [vmem:[%s857 + $0x1d0] sm:$0xff]
    %v917 = vld [vmem:[%s857 + $0x1d8] sm:$0xff]
    %v918 = vld [vmem:[%s857 + $0x1e0] sm:$0xff]
    %v919 = vld [vmem:[%s857 + $0x1e8] sm:$0xff]
    %v920 = vld [vmem:[%s857 + $0x1f0] sm:$0xff]
    %v921 = vld [vmem:[%s857 + $0x1f8] sm:$0xff]
    %922 = vmatpush.msra.mxu0 %v888
    %923 = vmatpush.msra.mxu0 %v886
    %924 = vmatpush.msra.mxu0 %v884
    %925 = vmatpush.msra.mxu0 %v882
    %926 = vmatpush.msra.mxu0 %v880
    %927 = vmatpush.msra.mxu0 %v878
    %928 = vmatpush.msra.mxu0 %v876
    %929 = vmatpush.msra.mxu0 %v874
    %930 = vmatpush.msra.mxu0 %v872
    %931 = vmatpush.msra.mxu0 %v870
    %932 = vmatpush.msra.mxu0 %v868
    %933 = vmatpush.msra.mxu0 %v866
    %934 = vmatpush.msra.mxu0 %v864
    %935 = vmatpush.msra.mxu0 %v862
    %936 = vmatpush.msra.mxu0 %v860
    %937 = vmatpush.msra.mxu0 %v858
    %938 = vmatmul.f32.gmra.mxu0 %v849
    %v939 = vpop.f32.mrf.mxu0
    %v940 = vadd.f32 %v227, %v939
    %941 = vmatmul.f32.gmra.mxu0 %v851
    %v942 = vpop.f32.mrf.mxu0
    %v943 = vadd.f32 %v230, %v942
    %944 = vmatmul.f32.gmra.mxu0 %v853
    %v945 = vpop.f32.mrf.mxu0
    %v946 = vadd.f32 %v233, %v945
    %947 = vmatmul.f32.gmra.mxu0 %v855
    %v948 = vpop.f32.mrf.mxu0
    %v949 = vadd.f32 %v236, %v948
    %950 = vdwg.mxu0
    %951 = vmatpush.msra.mxu0 %v920
    %952 = vmatpush.msra.mxu0 %v918
    %953 = vmatpush.msra.mxu0 %v916
    %954 = vmatpush.msra.mxu0 %v914
    %955 = vmatpush.msra.mxu0 %v912
    %956 = vmatpush.msra.mxu0 %v910
    %957 = vmatpush.msra.mxu0 %v908
    %958 = vmatpush.msra.mxu0 %v906
    %959 = vmatpush.msra.mxu0 %v904
    %960 = vmatpush.msra.mxu0 %v902
    %961 = vmatpush.msra.mxu0 %v900
    %962 = vmatpush.msra.mxu0 %v898
    %963 = vmatpush.msra.mxu0 %v896
    %964 = vmatpush.msra.mxu0 %v894
    %965 = vmatpush.msra.mxu0 %v892
    %966 = vmatpush.msra.mxu0 %v890
    %967 = vmatmul.f32.gmra.mxu0 %v850
    %v968 = vpop.f32.mrf.mxu0
    %v969 = vadd.f32 %v940, %v968
    %970 = vmatmul.f32.gmra.mxu0 %v852
    %v971 = vpop.f32.mrf.mxu0
    %v972 = vadd.f32 %v943, %v971
    %973 = vmatmul.f32.gmra.mxu0 %v854
    %v974 = vpop.f32.mrf.mxu0
    %v975 = vadd.f32 %v946, %v974
    %976 = vmatmul.f32.gmra.mxu0 %v856
    %v977 = vpop.f32.mrf.mxu0
    %v978 = vadd.f32 %v949, %v977
    %979 = vdwg.mxu0
    %980 = vmatpush.msra.mxu0 %v889
    %981 = vmatpush.msra.mxu0 %v887
    %982 = vmatpush.msra.mxu0 %v885
    %983 = vmatpush.msra.mxu0 %v883
    %984 = vmatpush.msra.mxu0 %v881
    %985 = vmatpush.msra.mxu0 %v879
    %986 = vmatpush.msra.mxu0 %v877
    %987 = vmatpush.msra.mxu0 %v875
    %988 = vmatpush.msra.mxu0 %v873
    %989 = vmatpush.msra.mxu0 %v871
    %990 = vmatpush.msra.mxu0 %v869
    %991 = vmatpush.msra.mxu0 %v867
    %992 = vmatpush.msra.mxu0 %v865
    %993 = vmatpush.msra.mxu0 %v863
    %994 = vmatpush.msra.mxu0 %v861
    %995 = vmatpush.msra.mxu0 %v859
    %996 = vmatmul.f32.gmra.mxu0 %v849
    %v997 = vpop.f32.mrf.mxu0
    %v998 = vadd.f32 %v256, %v997
    %999 = vmatmul.f32.gmra.mxu0 %v851
    %v1000 = vpop.f32.mrf.mxu0
    %v1001 = vadd.f32 %v259, %v1000
    %1002 = vmatmul.f32.gmra.mxu0 %v853
    %v1003 = vpop.f32.mrf.mxu0
    %v1004 = vadd.f32 %v262, %v1003
    %1005 = vmatmul.f32.gmra.mxu0 %v855
    %v1006 = vpop.f32.mrf.mxu0
    %v1007 = vadd.f32 %v265, %v1006
    %1008 = vdwg.mxu0
    %1009 = vmatpush.msra.mxu0 %v921
    %1010 = vmatpush.msra.mxu0 %v919
    %1011 = vmatpush.msra.mxu0 %v917
    %1012 = vmatpush.msra.mxu0 %v915
    %1013 = vmatpush.msra.mxu0 %v913
    %1014 = vmatpush.msra.mxu0 %v911
    %1015 = vmatpush.msra.mxu0 %v909
    %1016 = vmatpush.msra.mxu0 %v907
    %1017 = vmatpush.msra.mxu0 %v905
    %1018 = vmatpush.msra.mxu0 %v903
    %1019 = vmatpush.msra.mxu0 %v901
    %1020 = vmatpush.msra.mxu0 %v899
    %1021 = vmatpush.msra.mxu0 %v897
    %1022 = vmatpush.msra.mxu0 %v895
    %1023 = vmatpush.msra.mxu0 %v893
    %1024 = vmatpush.msra.mxu0 %v891
    %1025 = vmatmul.f32.gmra.mxu0 %v850
    %v1026 = vpop.f32.mrf.mxu0
    %v1027 = vadd.f32 %v998, %v1026
    %1028 = vmatmul.f32.gmra.mxu0 %v852
    %v1029 = vpop.f32.mrf.mxu0
    %v1030 = vadd.f32 %v1001, %v1029
    %1031 = vmatmul.f32.gmra.mxu0 %v854
    %v1032 = vpop.f32.mrf.mxu0
    %v1033 = vadd.f32 %v1004, %v1032
    %1034 = vmatmul.f32.gmra.mxu0 %v856
    %v1035 = vpop.f32.mrf.mxu0
    %v1036 = vadd.f32 %v1007, %v1035
    %1037 = vdwg.mxu0
    %v1038 = vperm.slane %v81, 4
    %v1039 = vperm.slane %v82, 4
    %v1040 = vadd.f32 %v969, %v1038
    %v1041 = vadd.f32 %v1027, %v1039
    %v1042 = vadd.f32 %v972, %v1038
    %v1043 = vadd.f32 %v1030, %v1039
    %v1044 = vadd.f32 %v975, %v1038
    %v1045 = vadd.f32 %v1033, %v1039
    %v1046 = vadd.f32 %v978, %v1038
    %v1047 = vadd.f32 %v1036, %v1039
    %v1048 = vmax.f32 %v1040, 0.0
    %v1049 = vmax.f32 %v1041, 0.0
    %v1050 = vmax.f32 %v1042, 0.0
    %v1051 = vmax.f32 %v1043, 0.0
    %v1052 = vmax.f32 %v1044, 0.0
    %v1053 = vmax.f32 %v1045, 0.0
    %v1054 = vmax.f32 %v1046, 0.0
    %v1055 = vmax.f32 %v1047, 0.0
    %s1056 = scalar_lea.vmem [#allocation4], 2048
    %v1057 = vld [vmem:[%s1056] sm:$0xff]
    %v1058 = vld [vmem:[%s1056 + $0x8] sm:$0xff]
    %v1059 = vld [vmem:[%s1056 + $0x10] sm:$0xff]
    %v1060 = vld [vmem:[%s1056 + $0x18] sm:$0xff]
    %v1061 = vld [vmem:[%s1056 + $0x20] sm:$0xff]
    %v1062 = vld [vmem:[%s1056 + $0x28] sm:$0xff]
    %v1063 = vld [vmem:[%s1056 + $0x30] sm:$0xff]
    %v1064 = vld [vmem:[%s1056 + $0x38] sm:$0xff]
    %v1065 = vld [vmem:[%s1056 + $0x40] sm:$0xff]
    %v1066 = vld [vmem:[%s1056 + $0x48] sm:$0xff]
    %v1067 = vld [vmem:[%s1056 + $0x50] sm:$0xff]
    %v1068 = vld [vmem:[%s1056 + $0x58] sm:$0xff]
    %v1069 = vld [vmem:[%s1056 + $0x60] sm:$0xff]
    %v1070 = vld [vmem:[%s1056 + $0x68] sm:$0xff]
    %v1071 = vld [vmem:[%s1056 + $0x70] sm:$0xff]
    %v1072 = vld [vmem:[%s1056 + $0x78] sm:$0xff]
    %v1073 = vld [vmem:[%s1056 + $0x80] sm:$0xff]
    %v1074 = vld [vmem:[%s1056 + $0x88] sm:$0xff]
    %v1075 = vld [vmem:[%s1056 + $0x90] sm:$0xff]
    %v1076 = vld [vmem:[%s1056 + $0x98] sm:$0xff]
    %v1077 = vld [vmem:[%s1056 + $0xa0] sm:$0xff]
    %v1078 = vld [vmem:[%s1056 + $0xa8] sm:$0xff]
    %v1079 = vld [vmem:[%s1056 + $0xb0] sm:$0xff]
    %v1080 = vld [vmem:[%s1056 + $0xb8] sm:$0xff]
    %v1081 = vld [vmem:[%s1056 + $0xc0] sm:$0xff]
    %v1082 = vld [vmem:[%s1056 + $0xc8] sm:$0xff]
    %v1083 = vld [vmem:[%s1056 + $0xd0] sm:$0xff]
    %v1084 = vld [vmem:[%s1056 + $0xd8] sm:$0xff]
    %v1085 = vld [vmem:[%s1056 + $0xe0] sm:$0xff]
    %v1086 = vld [vmem:[%s1056 + $0xe8] sm:$0xff]
    %v1087 = vld [vmem:[%s1056 + $0xf0] sm:$0xff]
    %v1088 = vld [vmem:[%s1056 + $0xf8] sm:$0xff]
    %v1089 = vld [vmem:[%s1056 + $0x100] sm:$0xff]
    %v1090 = vld [vmem:[%s1056 + $0x108] sm:$0xff]
    %v1091 = vld [vmem:[%s1056 + $0x110] sm:$0xff]
    %v1092 = vld [vmem:[%s1056 + $0x118] sm:$0xff]
    %v1093 = vld [vmem:[%s1056 + $0x120] sm:$0xff]
    %v1094 = vld [vmem:[%s1056 + $0x128] sm:$0xff]
    %v1095 = vld [vmem:[%s1056 + $0x130] sm:$0xff]
    %v1096 = vld [vmem:[%s1056 + $0x138] sm:$0xff]
    %v1097 = vld [vmem:[%s1056 + $0x140] sm:$0xff]
    %v1098 = vld [vmem:[%s1056 + $0x148] sm:$0xff]
    %v1099 = vld [vmem:[%s1056 + $0x150] sm:$0xff]
    %v1100 = vld [vmem:[%s1056 + $0x158] sm:$0xff]
    %v1101 = vld [vmem:[%s1056 + $0x160] sm:$0xff]
    %v1102 = vld [vmem:[%s1056 + $0x168] sm:$0xff]
    %v1103 = vld [vmem:[%s1056 + $0x170] sm:$0xff]
    %v1104 = vld [vmem:[%s1056 + $0x178] sm:$0xff]
    %v1105 = vld [vmem:[%s1056 + $0x180] sm:$0xff]
    %v1106 = vld [vmem:[%s1056 + $0x188] sm:$0xff]
    %v1107 = vld [vmem:[%s1056 + $0x190] sm:$0xff]
    %v1108 = vld [vmem:[%s1056 + $0x198] sm:$0xff]
    %v1109 = vld [vmem:[%s1056 + $0x1a0] sm:$0xff]
    %v1110 = vld [vmem:[%s1056 + $0x1a8] sm:$0xff]
    %v1111 = vld [vmem:[%s1056 + $0x1b0] sm:$0xff]
    %v1112 = vld [vmem:[%s1056 + $0x1b8] sm:$0xff]
    %v1113 = vld [vmem:[%s1056 + $0x1c0] sm:$0xff]
    %v1114 = vld [vmem:[%s1056 + $0x1c8] sm:$0xff]
    %v1115 = vld [vmem:[%s1056 + $0x1d0] sm:$0xff]
    %v1116 = vld [vmem:[%s1056 + $0x1d8] sm:$0xff]
    %v1117 = vld [vmem:[%s1056 + $0x1e0] sm:$0xff]
    %v1118 = vld [vmem:[%s1056 + $0x1e8] sm:$0xff]
    %v1119 = vld [vmem:[%s1056 + $0x1f0] sm:$0xff]
    %v1120 = vld [vmem:[%s1056 + $0x1f8] sm:$0xff]
    %v1121 = vperm.slane %v81, 5
    %v1122 = vperm.slane %v82, 5
    %1123 = vmatpush.msra.mxu0 %v1087
    %1124 = vmatpush.msra.mxu0 %v1085
    %1125 = vmatpush.msra.mxu0 %v1083
    %1126 = vmatpush.msra.mxu0 %v1081
    %1127 = vmatpush.msra.mxu0 %v1079
    %1128 = vmatpush.msra.mxu0 %v1077
    %1129 = vmatpush.msra.mxu0 %v1075
    %1130 = vmatpush.msra.mxu0 %v1073
    %1131 = vmatpush.msra.mxu0 %v1071
    %1132 = vmatpush.msra.mxu0 %v1069
    %1133 = vmatpush.msra.mxu0 %v1067
    %1134 = vmatpush.msra.mxu0 %v1065
    %1135 = vmatpush.msra.mxu0 %v1063
    %1136 = vmatpush.msra.mxu0 %v1061
    %1137 = vmatpush.msra.mxu0 %v1059
    %1138 = vmatpush.msra.mxu0 %v1057
    %1139 = vmatmul.f32.gmra.mxu0 %v1048
    %v1140 = vpop.f32.mrf.mxu0
    %v1141 = vadd.f32 %v1121, %v1140
    %1142 = vmatmul.f32.gmra.mxu0 %v1050
    %v1143 = vpop.f32.mrf.mxu0
    %v1144 = vadd.f32 %v1121, %v1143
    %1145 = vmatmul.f32.gmra.mxu0 %v1052
    %v1146 = vpop.f32.mrf.mxu0
    %v1147 = vadd.f32 %v1121, %v1146
    %1148 = vmatmul.f32.gmra.mxu0 %v1054
    %v1149 = vpop.f32.mrf.mxu0
    %v1150 = vadd.f32 %v1121, %v1149
    %1151 = vdwg.mxu0
    %1152 = vmatpush.msra.mxu0 %v1119
    %1153 = vmatpush.msra.mxu0 %v1117
    %1154 = vmatpush.msra.mxu0 %v1115
    %1155 = vmatpush.msra.mxu0 %v1113
    %1156 = vmatpush.msra.mxu0 %v1111
    %1157 = vmatpush.msra.mxu0 %v1109
    %1158 = vmatpush.msra.mxu0 %v1107
    %1159 = vmatpush.msra.mxu0 %v1105
    %1160 = vmatpush.msra.mxu0 %v1103
    %1161 = vmatpush.msra.mxu0 %v1101
    %1162 = vmatpush.msra.mxu0 %v1099
    %1163 = vmatpush.msra.mxu0 %v1097
    %1164 = vmatpush.msra.mxu0 %v1095
    %1165 = vmatpush.msra.mxu0 %v1093
    %1166 = vmatpush.msra.mxu0 %v1091
    %1167 = vmatpush.msra.mxu0 %v1089
    %1168 = vmatmul.f32.gmra.mxu0 %v1049
    %v1169 = vpop.f32.mrf.mxu0
    %v1170 = vadd.f32 %v1141, %v1169
    %1171 = vmatmul.f32.gmra.mxu0 %v1051
    %v1172 = vpop.f32.mrf.mxu0
    %v1173 = vadd.f32 %v1144, %v1172
    %1174 = vmatmul.f32.gmra.mxu0 %v1053
    %v1175 = vpop.f32.mrf.mxu0
    %v1176 = vadd.f32 %v1147, %v1175
    %1177 = vmatmul.f32.gmra.mxu0 %v1055
    %v1178 = vpop.f32.mrf.mxu0
    %v1179 = vadd.f32 %v1150, %v1178
    %1180 = vdwg.mxu0
    %1181 = vmatpush.msra.mxu0 %v1088
    %1182 = vmatpush.msra.mxu0 %v1086
    %1183 = vmatpush.msra.mxu0 %v1084
    %1184 = vmatpush.msra.mxu0 %v1082
    %1185 = vmatpush.msra.mxu0 %v1080
    %1186 = vmatpush.msra.mxu0 %v1078
    %1187 = vmatpush.msra.mxu0 %v1076
    %1188 = vmatpush.msra.mxu0 %v1074
    %1189 = vmatpush.msra.mxu0 %v1072
    %1190 = vmatpush.msra.mxu0 %v1070
    %1191 = vmatpush.msra.mxu0 %v1068
    %1192 = vmatpush.msra.mxu0 %v1066
    %1193 = vmatpush.msra.mxu0 %v1064
    %1194 = vmatpush.msra.mxu0 %v1062
    %1195 = vmatpush.msra.mxu0 %v1060
    %1196 = vmatpush.msra.mxu0 %v1058
    %1197 = vmatmul.f32.gmra.mxu0 %v1048
    %v1198 = vpop.f32.mrf.mxu0
    %v1199 = vadd.f32 %v1122, %v1198
    %1200 = vmatmul.f32.gmra.mxu0 %v1050
    %v1201 = vpop.f32.mrf.mxu0
    %v1202 = vadd.f32 %v1122, %v1201
    %1203 = vmatmul.f32.gmra.mxu0 %v1052
    %v1204 = vpop.f32.mrf.mxu0
    %v1205 = vadd.f32 %v1122, %v1204
    %1206 = vmatmul.f32.gmra.mxu0 %v1054
    %v1207 = vpop.f32.mrf.mxu0
    %v1208 = vadd.f32 %v1122, %v1207
    %1209 = vdwg.mxu0
    %1210 = vmatpush.msra.mxu0 %v1120
    %1211 = vmatpush.msra.mxu0 %v1118
    %1212 = vmatpush.msra.mxu0 %v1116
    %1213 = vmatpush.msra.mxu0 %v1114
    %1214 = vmatpush.msra.mxu0 %v1112
    %1215 = vmatpush.msra.mxu0 %v1110
    %1216 = vmatpush.msra.mxu0 %v1108
    %1217 = vmatpush.msra.mxu0 %v1106
    %1218 = vmatpush.msra.mxu0 %v1104
    %1219 = vmatpush.msra.mxu0 %v1102
    %1220 = vmatpush.msra.mxu0 %v1100
    %1221 = vmatpush.msra.mxu0 %v1098
    %1222 = vmatpush.msra.mxu0 %v1096
    %1223 = vmatpush.msra.mxu0 %v1094
    %1224 = vmatpush.msra.mxu0 %v1092
    %1225 = vmatpush.msra.mxu0 %v1090
    %1226 = vmatmul.f32.gmra.mxu0 %v1049
    %v1227 = vpop.f32.mrf.mxu0
    %v1228 = vadd.f32 %v1199, %v1227
    %1229 = vmatmul.f32.gmra.mxu0 %v1051
    %v1230 = vpop.f32.mrf.mxu0
    %v1231 = vadd.f32 %v1202, %v1230
    %1232 = vmatmul.f32.gmra.mxu0 %v1053
    %v1233 = vpop.f32.mrf.mxu0
    %v1234 = vadd.f32 %v1205, %v1233
    %1235 = vmatmul.f32.gmra.mxu0 %v1055
    %v1236 = vpop.f32.mrf.mxu0
    %v1237 = vadd.f32 %v1208, %v1236
    %1238 = vdwg.mxu0
    %v1239 = vmax.f32 %v1170, 0.0
    %v1240 = vmax.f32 %v1228, 0.0
    %v1241 = vmax.f32 %v1173, 0.0
    %v1242 = vmax.f32 %v1231, 0.0
    %v1243 = vmax.f32 %v1176, 0.0
    %v1244 = vmax.f32 %v1234, 0.0
    %v1245 = vmax.f32 %v1179, 0.0
    %v1246 = vmax.f32 %v1237, 0.0
    %s1247 = scalar_lea.vmem [#allocation4], 2560
    %v1248 = vld [vmem:[%s1247] sm:$0xff]
    %v1249 = vld [vmem:[%s1247 + $0x8] sm:$0xff]
    %v1250 = vld [vmem:[%s1247 + $0x10] sm:$0xff]
    %v1251 = vld [vmem:[%s1247 + $0x18] sm:$0xff]
    %v1252 = vld [vmem:[%s1247 + $0x20] sm:$0xff]
    %v1253 = vld [vmem:[%s1247 + $0x28] sm:$0xff]
    %v1254 = vld [vmem:[%s1247 + $0x30] sm:$0xff]
    %v1255 = vld [vmem:[%s1247 + $0x38] sm:$0xff]
    %v1256 = vld [vmem:[%s1247 + $0x40] sm:$0xff]
    %v1257 = vld [vmem:[%s1247 + $0x48] sm:$0xff]
    %v1258 = vld [vmem:[%s1247 + $0x50] sm:$0xff]
    %v1259 = vld [vmem:[%s1247 + $0x58] sm:$0xff]
    %v1260 = vld [vmem:[%s1247 + $0x60] sm:$0xff]
    %v1261 = vld [vmem:[%s1247 + $0x68] sm:$0xff]
    %v1262 = vld [vmem:[%s1247 + $0x70] sm:$0xff]
    %v1263 = vld [vmem:[%s1247 + $0x78] sm:$0xff]
    %v1264 = vld [vmem:[%s1247 + $0x80] sm:$0xff]
    %v1265 = vld [vmem:[%s1247 + $0x88] sm:$0xff]
    %v1266 = vld [vmem:[%s1247 + $0x90] sm:$0xff]
    %v1267 = vld [vmem:[%s1247 + $0x98] sm:$0xff]
    %v1268 = vld [vmem:[%s1247 + $0xa0] sm:$0xff]
    %v1269 = vld [vmem:[%s1247 + $0xa8] sm:$0xff]
    %v1270 = vld [vmem:[%s1247 + $0xb0] sm:$0xff]
    %v1271 = vld [vmem:[%s1247 + $0xb8] sm:$0xff]
    %v1272 = vld [vmem:[%s1247 + $0xc0] sm:$0xff]
    %v1273 = vld [vmem:[%s1247 + $0xc8] sm:$0xff]
    %v1274 = vld [vmem:[%s1247 + $0xd0] sm:$0xff]
    %v1275 = vld [vmem:[%s1247 + $0xd8] sm:$0xff]
    %v1276 = vld [vmem:[%s1247 + $0xe0] sm:$0xff]
    %v1277 = vld [vmem:[%s1247 + $0xe8] sm:$0xff]
    %v1278 = vld [vmem:[%s1247 + $0xf0] sm:$0xff]
    %v1279 = vld [vmem:[%s1247 + $0xf8] sm:$0xff]
    %v1280 = vld [vmem:[%s1247 + $0x100] sm:$0xff]
    %v1281 = vld [vmem:[%s1247 + $0x108] sm:$0xff]
    %v1282 = vld [vmem:[%s1247 + $0x110] sm:$0xff]
    %v1283 = vld [vmem:[%s1247 + $0x118] sm:$0xff]
    %v1284 = vld [vmem:[%s1247 + $0x120] sm:$0xff]
    %v1285 = vld [vmem:[%s1247 + $0x128] sm:$0xff]
    %v1286 = vld [vmem:[%s1247 + $0x130] sm:$0xff]
    %v1287 = vld [vmem:[%s1247 + $0x138] sm:$0xff]
    %v1288 = vld [vmem:[%s1247 + $0x140] sm:$0xff]
    %v1289 = vld [vmem:[%s1247 + $0x148] sm:$0xff]
    %v1290 = vld [vmem:[%s1247 + $0x150] sm:$0xff]
    %v1291 = vld [vmem:[%s1247 + $0x158] sm:$0xff]
    %v1292 = vld [vmem:[%s1247 + $0x160] sm:$0xff]
    %v1293 = vld [vmem:[%s1247 + $0x168] sm:$0xff]
    %v1294 = vld [vmem:[%s1247 + $0x170] sm:$0xff]
    %v1295 = vld [vmem:[%s1247 + $0x178] sm:$0xff]
    %v1296 = vld [vmem:[%s1247 + $0x180] sm:$0xff]
    %v1297 = vld [vmem:[%s1247 + $0x188] sm:$0xff]
    %v1298 = vld [vmem:[%s1247 + $0x190] sm:$0xff]
    %v1299 = vld [vmem:[%s1247 + $0x198] sm:$0xff]
    %v1300 = vld [vmem:[%s1247 + $0x1a0] sm:$0xff]
    %v1301 = vld [vmem:[%s1247 + $0x1a8] sm:$0xff]
    %v1302 = vld [vmem:[%s1247 + $0x1b0] sm:$0xff]
    %v1303 = vld [vmem:[%s1247 + $0x1b8] sm:$0xff]
    %v1304 = vld [vmem:[%s1247 + $0x1c0] sm:$0xff]
    %v1305 = vld [vmem:[%s1247 + $0x1c8] sm:$0xff]
    %v1306 = vld [vmem:[%s1247 + $0x1d0] sm:$0xff]
    %v1307 = vld [vmem:[%s1247 + $0x1d8] sm:$0xff]
    %v1308 = vld [vmem:[%s1247 + $0x1e0] sm:$0xff]
    %v1309 = vld [vmem:[%s1247 + $0x1e8] sm:$0xff]
    %v1310 = vld [vmem:[%s1247 + $0x1f0] sm:$0xff]
    %v1311 = vld [vmem:[%s1247 + $0x1f8] sm:$0xff]
    %v1312 = vperm.slane %v81, 6
    %v1313 = vperm.slane %v82, 6
    %1314 = vmatpush.msra.mxu0 %v1278
    %1315 = vmatpush.msra.mxu0 %v1276
    %1316 = vmatpush.msra.mxu0 %v1274
    %1317 = vmatpush.msra.mxu0 %v1272
    %1318 = vmatpush.msra.mxu0 %v1270
    %1319 = vmatpush.msra.mxu0 %v1268
    %1320 = vmatpush.msra.mxu0 %v1266
    %1321 = vmatpush.msra.mxu0 %v1264
    %1322 = vmatpush.msra.mxu0 %v1262
    %1323 = vmatpush.msra.mxu0 %v1260
    %1324 = vmatpush.msra.mxu0 %v1258
    %1325 = vmatpush.msra.mxu0 %v1256
    %1326 = vmatpush.msra.mxu0 %v1254
    %1327 = vmatpush.msra.mxu0 %v1252
    %1328 = vmatpush.msra.mxu0 %v1250
    %1329 = vmatpush.msra.mxu0 %v1248
    %1330 = vmatmul.f32.gmra.mxu0 %v1239
    %v1331 = vpop.f32.mrf.mxu0
    %v1332 = vadd.f32 %v1312, %v1331
    %1333 = vmatmul.f32.gmra.mxu0 %v1241
    %v1334 = vpop.f32.mrf.mxu0
    %v1335 = vadd.f32 %v1312, %v1334
    %1336 = vmatmul.f32.gmra.mxu0 %v1243
    %v1337 = vpop.f32.mrf.mxu0
    %v1338 = vadd.f32 %v1312, %v1337
    %1339 = vmatmul.f32.gmra.mxu0 %v1245
    %v1340 = vpop.f32.mrf.mxu0
    %v1341 = vadd.f32 %v1312, %v1340
    %1342 = vdwg.mxu0
    %1343 = vmatpush.msra.mxu0 %v1310
    %1344 = vmatpush.msra.mxu0 %v1308
    %1345 = vmatpush.msra.mxu0 %v1306
    %1346 = vmatpush.msra.mxu0 %v1304
    %1347 = vmatpush.msra.mxu0 %v1302
    %1348 = vmatpush.msra.mxu0 %v1300
    %1349 = vmatpush.msra.mxu0 %v1298
    %1350 = vmatpush.msra.mxu0 %v1296
    %1351 = vmatpush.msra.mxu0 %v1294
    %1352 = vmatpush.msra.mxu0 %v1292
    %1353 = vmatpush.msra.mxu0 %v1290
    %1354 = vmatpush.msra.mxu0 %v1288
    %1355 = vmatpush.msra.mxu0 %v1286
    %1356 = vmatpush.msra.mxu0 %v1284
    %1357 = vmatpush.msra.mxu0 %v1282
    %1358 = vmatpush.msra.mxu0 %v1280
    %1359 = vmatmul.f32.gmra.mxu0 %v1240
    %v1360 = vpop.f32.mrf.mxu0
    %v1361 = vadd.f32 %v1332, %v1360
    %1362 = vmatmul.f32.gmra.mxu0 %v1242
    %v1363 = vpop.f32.mrf.mxu0
    %v1364 = vadd.f32 %v1335, %v1363
    %1365 = vmatmul.f32.gmra.mxu0 %v1244
    %v1366 = vpop.f32.mrf.mxu0
    %v1367 = vadd.f32 %v1338, %v1366
    %1368 = vmatmul.f32.gmra.mxu0 %v1246
    %v1369 = vpop.f32.mrf.mxu0
    %v1370 = vadd.f32 %v1341, %v1369
    %1371 = vdwg.mxu0
    %1372 = vmatpush.msra.mxu0 %v1279
    %1373 = vmatpush.msra.mxu0 %v1277
    %1374 = vmatpush.msra.mxu0 %v1275
    %1375 = vmatpush.msra.mxu0 %v1273
    %1376 = vmatpush.msra.mxu0 %v1271
    %1377 = vmatpush.msra.mxu0 %v1269
    %1378 = vmatpush.msra.mxu0 %v1267
    %1379 = vmatpush.msra.mxu0 %v1265
    %1380 = vmatpush.msra.mxu0 %v1263
    %1381 = vmatpush.msra.mxu0 %v1261
    %1382 = vmatpush.msra.mxu0 %v1259
    %1383 = vmatpush.msra.mxu0 %v1257
    %1384 = vmatpush.msra.mxu0 %v1255
    %1385 = vmatpush.msra.mxu0 %v1253
    %1386 = vmatpush.msra.mxu0 %v1251
    %1387 = vmatpush.msra.mxu0 %v1249
    %1388 = vmatmul.f32.gmra.mxu0 %v1239
    %v1389 = vpop.f32.mrf.mxu0
    %v1390 = vadd.f32 %v1313, %v1389
    %1391 = vmatmul.f32.gmra.mxu0 %v1241
    %v1392 = vpop.f32.mrf.mxu0
    %v1393 = vadd.f32 %v1313, %v1392
    %1394 = vmatmul.f32.gmra.mxu0 %v1243
    %v1395 = vpop.f32.mrf.mxu0
    %v1396 = vadd.f32 %v1313, %v1395
    %1397 = vmatmul.f32.gmra.mxu0 %v1245
    %v1398 = vpop.f32.mrf.mxu0
    %v1399 = vadd.f32 %v1313, %v1398
    %1400 = vdwg.mxu0
    %1401 = vmatpush.msra.mxu0 %v1311
    %1402 = vmatpush.msra.mxu0 %v1309
    %1403 = vmatpush.msra.mxu0 %v1307
    %1404 = vmatpush.msra.mxu0 %v1305
    %1405 = vmatpush.msra.mxu0 %v1303
    %1406 = vmatpush.msra.mxu0 %v1301
    %1407 = vmatpush.msra.mxu0 %v1299
    %1408 = vmatpush.msra.mxu0 %v1297
    %1409 = vmatpush.msra.mxu0 %v1295
    %1410 = vmatpush.msra.mxu0 %v1293
    %1411 = vmatpush.msra.mxu0 %v1291
    %1412 = vmatpush.msra.mxu0 %v1289
    %1413 = vmatpush.msra.mxu0 %v1287
    %1414 = vmatpush.msra.mxu0 %v1285
    %1415 = vmatpush.msra.mxu0 %v1283
    %1416 = vmatpush.msra.mxu0 %v1281
    %1417 = vmatmul.f32.gmra.mxu0 %v1240
    %v1418 = vpop.f32.mrf.mxu0
    %v1419 = vadd.f32 %v1390, %v1418
    %1420 = vmatmul.f32.gmra.mxu0 %v1242
    %v1421 = vpop.f32.mrf.mxu0
    %v1422 = vadd.f32 %v1393, %v1421
    %1423 = vmatmul.f32.gmra.mxu0 %v1244
    %v1424 = vpop.f32.mrf.mxu0
    %v1425 = vadd.f32 %v1396, %v1424
    %1426 = vmatmul.f32.gmra.mxu0 %v1246
    %v1427 = vpop.f32.mrf.mxu0
    %v1428 = vadd.f32 %v1399, %v1427
    %1429 = vdwg.mxu0
    %v1430 = vmax.f32 %v1361, 0.0
    %v1431 = vmax.f32 %v1419, 0.0
    %v1432 = vmax.f32 %v1364, 0.0
    %v1433 = vmax.f32 %v1422, 0.0
    %v1434 = vmax.f32 %v1367, 0.0
    %v1435 = vmax.f32 %v1425, 0.0
    %v1436 = vmax.f32 %v1370, 0.0
    %v1437 = vmax.f32 %v1428, 0.0
    %v1438 = vld [vmem:[#allocation6] sm:$0xff]
    %v1439 = vld [vmem:[#allocation6 + $0x8] sm:$0xff]
    %v1440 = vld [vmem:[#allocation6 + $0x10] sm:$0xff]
    %v1441 = vld [vmem:[#allocation6 + $0x18] sm:$0xff]
    %v1442 = vld [vmem:[#allocation6 + $0x20] sm:$0xff]
    %v1443 = vld [vmem:[#allocation6 + $0x28] sm:$0xff]
    %v1444 = vld [vmem:[#allocation6 + $0x30] sm:$0xff]
    %v1445 = vld [vmem:[#allocation6 + $0x38] sm:$0xff]
    %v1446 = vld [vmem:[#allocation6 + $0x40] sm:$0xff]
    %v1447 = vld [vmem:[#allocation6 + $0x48] sm:$0xff]
    %v1448 = vld [vmem:[#allocation6 + $0x50] sm:$0xff]
    %v1449 = vld [vmem:[#allocation6 + $0x58] sm:$0xff]
    %v1450 = vld [vmem:[#allocation6 + $0x60] sm:$0xff]
    %v1451 = vld [vmem:[#allocation6 + $0x68] sm:$0xff]
    %v1452 = vld [vmem:[#allocation6 + $0x70] sm:$0xff]
    %v1453 = vld [vmem:[#allocation6 + $0x78] sm:$0xff]
    %v1454 = vld [vmem:[#allocation6 + $0x80] sm:$0xff]
    %v1455 = vld [vmem:[#allocation6 + $0x88] sm:$0xff]
    %v1456 = vld [vmem:[#allocation6 + $0x90] sm:$0xff]
    %v1457 = vld [vmem:[#allocation6 + $0x98] sm:$0xff]
    %v1458 = vld [vmem:[#allocation6 + $0xa0] sm:$0xff]
    %v1459 = vld [vmem:[#allocation6 + $0xa8] sm:$0xff]
    %v1460 = vld [vmem:[#allocation6 + $0xb0] sm:$0xff]
    %v1461 = vld [vmem:[#allocation6 + $0xb8] sm:$0xff]
    %v1462 = vld [vmem:[#allocation6 + $0xc0] sm:$0xff]
    %v1463 = vld [vmem:[#allocation6 + $0xc8] sm:$0xff]
    %v1464 = vld [vmem:[#allocation6 + $0xd0] sm:$0xff]
    %v1465 = vld [vmem:[#allocation6 + $0xd8] sm:$0xff]
    %v1466 = vld [vmem:[#allocation6 + $0xe0] sm:$0xff]
    %v1467 = vld [vmem:[#allocation6 + $0xe8] sm:$0xff]
    %v1468 = vld [vmem:[#allocation6 + $0xf0] sm:$0xff]
    %v1469 = vld [vmem:[#allocation6 + $0xf8] sm:$0xff]
    %v1470 = vperm.slane %v81, 7
    %1471 = vmatpush.msra.mxu0 %v1453
    %1472 = vmatpush.msra.mxu0 %v1452
    %1473 = vmatpush.msra.mxu0 %v1451
    %1474 = vmatpush.msra.mxu0 %v1450
    %1475 = vmatpush.msra.mxu0 %v1449
    %1476 = vmatpush.msra.mxu0 %v1448
    %1477 = vmatpush.msra.mxu0 %v1447
    %1478 = vmatpush.msra.mxu0 %v1446
    %1479 = vmatpush.msra.mxu0 %v1445
    %1480 = vmatpush.msra.mxu0 %v1444
    %1481 = vmatpush.msra.mxu0 %v1443
    %1482 = vmatpush.msra.mxu0 %v1442
    %1483 = vmatpush.msra.mxu0 %v1441
    %1484 = vmatpush.msra.mxu0 %v1440
    %1485 = vmatpush.msra.mxu0 %v1439
    %1486 = vmatpush.msra.mxu0 %v1438
    %1487 = vmatmul.f32.gmra.mxu0 %v1430
    %v1488 = vpop.f32.mrf.mxu0
    %v1489 = vadd.f32 %v1470, %v1488
    %1490 = vmatmul.f32.gmra.mxu0 %v1432
    %v1491 = vpop.f32.mrf.mxu0
    %v1492 = vadd.f32 %v1470, %v1491
    %1493 = vmatmul.f32.gmra.mxu0 %v1434
    %v1494 = vpop.f32.mrf.mxu0
    %v1495 = vadd.f32 %v1470, %v1494
    %1496 = vmatmul.f32.gmra.mxu0 %v1436
    %v1497 = vpop.f32.mrf.mxu0
    %v1498 = vadd.f32 %v1470, %v1497
    %1499 = vdwg.mxu0
    %1500 = vmatpush.msra.mxu0 %v1469
    %1501 = vmatpush.msra.mxu0 %v1468
    %1502 = vmatpush.msra.mxu0 %v1467
    %1503 = vmatpush.msra.mxu0 %v1466
    %1504 = vmatpush.msra.mxu0 %v1465
    %1505 = vmatpush.msra.mxu0 %v1464
    %1506 = vmatpush.msra.mxu0 %v1463
    %1507 = vmatpush.msra.mxu0 %v1462
    %1508 = vmatpush.msra.mxu0 %v1461
    %1509 = vmatpush.msra.mxu0 %v1460
    %1510 = vmatpush.msra.mxu0 %v1459
    %1511 = vmatpush.msra.mxu0 %v1458
    %1512 = vmatpush.msra.mxu0 %v1457
    %1513 = vmatpush.msra.mxu0 %v1456
    %1514 = vmatpush.msra.mxu0 %v1455
    %1515 = vmatpush.msra.mxu0 %v1454
    %1516 = vmatmul.f32.gmra.mxu0 %v1431
    %v1517 = vpop.f32.mrf.mxu0
    %v1518 = vadd.f32 %v1489, %v1517
    %1519 = vmatmul.f32.gmra.mxu0 %v1433
    %v1520 = vpop.f32.mrf.mxu0
    %v1521 = vadd.f32 %v1492, %v1520
    %1522 = vmatmul.f32.gmra.mxu0 %v1435
    %v1523 = vpop.f32.mrf.mxu0
    %v1524 = vadd.f32 %v1495, %v1523
    %1525 = vmatmul.f32.gmra.mxu0 %v1437
    %v1526 = vpop.f32.mrf.mxu0
    %v1527 = vadd.f32 %v1498, %v1526
    %1528 = vdwg.mxu0
    %v1529 = vmax.f32 %v1518, 0.0
    %v1530 = vmax.f32 %v1521, 0.0
    %v1531 = vmax.f32 %v1524, 0.0
    %v1532 = vmax.f32 %v1527, 0.0
    %1533 = vst [vmem:[%s5] sm:$0xff] %v1529
    %1534 = vst [vmem:[%s5 + $0x8] sm:$0xff] %v1530
    %1535 = vst [vmem:[%s5 + $0x10] sm:$0xff] %v1531
    %1536 = vst [vmem:[%s5 + $0x18] sm:$0xff] %v1532
    // Predicated region
    $region38: #{inverse_dynamics_forward.1} parent=1 // pred_check
      _
    $region39: #{inverse_dynamics_forward.1} parent=1 // pred_check_branch
      %1538 = sbr.rel (0) target = $region41
    $region40: #{inverse_dynamics_forward.1} parent=1 // pred_region
      _
    $region41: #{inverse_dynamics_forward.1} parent=1 // pred_fallthru
      _
    // Predicated region
    $region42: #{inverse_dynamics_forward.1} parent=1 // pred_check
      _
    $region43: #{inverse_dynamics_forward.1} parent=1 // pred_check_branch
      %1540 = sbr.rel (0) target = $region45
    $region44: #{inverse_dynamics_forward.1} parent=1 // pred_region
      _
    $region45: #{inverse_dynamics_forward.1} parent=1 // pred_fallthru
      _
    %1541 = vsyncpa [#allocation3], 1
    %1542 = vsyncpa [#allocation5], 1
    %1543 = vsyncpa [#allocation8], 1

</llo_original>
